<compile_context>
chip_gen: v6e
topology: v6e:2x2x1
jax: 0.10.0
libtpu: 0.0.40
codegen_flags: <defaults>
</compile_context>

<pallas_src>
import jax
import jax.numpy as jnp
from jax import lax
from jax.experimental import pallas as pl
from jax.experimental.pallas import tpu as pltpu


# ---------------------------------------------------------------------------
# Kernel
# ---------------------------------------------------------------------------
def _head_kernel(x_ref, w_ref, o_ref):
    # x_ref: (Bt, T, C) bf16   w_ref: (C, 3*Hp) bf16 (k | q*scale | v, lane-aligned slots)
    # o_ref: (Bt, T, H)
    Bt, T, C = x_ref.shape
    Hp = w_ref.shape[1] // 3
    H = o_ref.shape[2]

    x = x_ref[...]
    if x.dtype != jnp.bfloat16:           # no-op when the producer already gives bf16
        x = x.astype(jnp.bfloat16)
    w = w_ref[...]                        # prepared once in the wrapper, already bf16

    # Fused projection: one (Bt*T, C) @ (C, 3*Hp) MXU matmul, f32 accumulation.
    kqv = lax.dot_general(
        x.reshape(Bt * T, C), w,
        dimension_numbers=(((1,), (0,)), ((), ())),
        preferred_element_type=jnp.float32,
    )                                                       # (Bt*T, 3*Hp) f32

    # 128-lane-aligned slices -> no lane rotations. Padded head columns are zero.
    k = kqv[:, 0 * Hp:1 * Hp].reshape(Bt, T, Hp).astype(jnp.bfloat16)
    q = kqv[:, 1 * Hp:2 * Hp].reshape(Bt, T, Hp).astype(jnp.bfloat16)   # scale pre-folded
    v = kqv[:, 2 * Hp:2 * Hp + H].reshape(Bt, T, H).astype(jnp.bfloat16)

    # Scores: contract the head axis directly (no explicit transpose). Zero-padded
    # head columns of q and k contribute 0, so the padded contraction is exact.
    wei = jnp.einsum("bqh,bkh->bqk", q, k,
                     preferred_element_type=jnp.float32)    # (Bt, T, T) f32

    # Causal (lower-triangular) mask; diagonal always kept so -inf is safe.
    row = lax.broadcasted_iota(jnp.int32, (T, T), 0)
    col = lax.broadcasted_iota(jnp.int32, (T, T), 1)
    wei = jnp.where((row >= col)[None, :, :], wei, -jnp.inf)

    # Numerically stable softmax, single f32 score temporary (exp overwrites wei).
    wei = wei - jnp.max(wei, axis=-1, keepdims=True)
    wei = jnp.exp(wei)
    p = wei * pl.reciprocal(jnp.sum(wei, axis=-1, keepdims=True), approx=True)

    out = jnp.einsum("bqk,bkh->bqh", p.astype(jnp.bfloat16), v,
                     preferred_element_type=jnp.float32)    # (Bt, T, H) f32
    o_ref[...] = out.astype(o_ref.dtype)


# ---------------------------------------------------------------------------
# Wrapper-side (one-time) weight preparation and tiling heuristics
# ---------------------------------------------------------------------------
def prepare_head_weights(wk, wq, wv, dtype=jnp.bfloat16):
    """Build the fused, lane-aligned, pre-scaled weight matrix ONCE (hoisted out of
    the per-call path). wk/wq/wv: (C, H) == PyTorch Linear weight.T. Returns (C, 3*Hp)."""
    C, H = wk.shape
    Hp = max(128, pl.cdiv(H, 128) * 128)     # each projection gets a 128-lane-aligned slot
    scale = C ** -0.5                         # PyTorch scales by n_emb (C), not head_size
    w = jnp.zeros((C, 3 * Hp), dtype=jnp.float32)
    w = w.at[:, 0 * Hp:0 * Hp + H].set(wk.astype(jnp.float32))
    w = w.at[:, 1 * Hp:1 * Hp + H].set(wq.astype(jnp.float32) * scale)  # fold score scale
    w = w.at[:, 2 * Hp:2 * Hp + H].set(wv.astype(jnp.float32))
    return w.astype(dtype)


def _vmem_config():
    """Generation-aware VMEM limit, planning budget and minimum grid-step count."""
    try:
        cap = pltpu.get_tpu_info().vmem_capacity_bytes
    except Exception:
        cap = 64 * 1024 * 1024               # conservative (v7x per-TC) fallback
    if cap >= 100 * 1024 * 1024:              # v5e / v6e: 128 MiB physical
        return 96 * 1024 * 1024, 64 * 1024 * 1024, 3   # 1 TC: >=3 steps for overlap
    else:                                     # v7x: 64 MiB per TensorCore
        return 48 * 1024 * 1024, 28 * 1024 * 1024, 4   # 2 TCs: >=2 blocks per core


def _pick_batch_block(B, T, C, H, Hp, x_itemsize, out_itemsize, budget_bytes, min_steps):
    """Largest divisor of B whose per-step working set fits the budget, keeping at
    least `min_steps` grid steps (when possible) for pipelining / megacore."""
    per_b = (2 * T * C * x_itemsize          # x block, double-buffered
             + T * 3 * Hp * 4                # fused kqv accumulator (f32)
             + 2 * T * Hp * 2 + T * H * 2    # k/q (padded) + v bf16 copies
             + 2 * T * T * 4                 # score f32 temp (+ headroom for exp copy)
             + T * T * 2                     # probs bf16
             + T * H * 4                     # output f32 temp
             + 2 * T * H * out_itemsize)     # out block, double-buffered
    max_bt = max(1, budget_bytes // per_b)
    best = 1
    for d in range(1, B + 1):
        if B % d != 0 or d > max_bt:
            continue
        if B >= min_steps and B // d < min_steps:
            continue
        best = max(best, d)
    return best


def head_forward(x, w_fused, head_size, *, batch_block=None):
    """x: (B, T, C) (bf16 preferred); w_fused: output of prepare_head_weights.
    Returns (B, T, head_size) in x.dtype."""
    B, T, C = x.shape
    Hp = w_fused.shape[1] // 3
    H = head_size
    vmem_limit, vmem_budget, min_steps = _vmem_config()

    if batch_block is None:
        batch_block = _pick_batch_block(
            B, T, C, H, Hp,
            x_itemsize=jnp.dtype(x.dtype).itemsize,
            out_itemsize=jnp.dtype(x.dtype).itemsize,
            budget_bytes=vmem_budget, min_steps=min_steps)
    assert B % batch_block == 0, "batch_block must divide B"
    grid = (B // batch_block,)

    return pl.pallas_call(
        _head_kernel,
        out_shape=jax.ShapeDtypeStruct((B, T, H), x.dtype),
        grid_spec=pltpu.PrefetchScalarGridSpec(
            num_scalar_prefetch=0,
            grid=grid,
            in_specs=[
                pl.BlockSpec((batch_block, T, C), lambda b: (b, 0, 0)),
                pl.BlockSpec((C, 3 * Hp), lambda b: (0, 0)),     # weights stay resident
            ],
            out_specs=pl.BlockSpec((batch_block, T, H), lambda b: (b, 0, 0)),
        ),
        compiler_params=pltpu.CompilerParams(
            dimension_semantics=("parallel",),
            vmem_limit_bytes=vmem_limit,
        ),
    )(x, w_fused)


# ---------------------------------------------------------------------------
# Pure-JAX reference (mirrors the PyTorch forward, eval-mode dropout)
# ---------------------------------------------------------------------------
def head_reference(x, wk, wq, wv, *, matmul_dtype=jnp.float32, fold_scale=False):
    """matmul_dtype=f32                  -> exact PyTorch-semantics reference.
       matmul_dtype=bf16, fold_scale=True -> mirrors the kernel numerics
       (bf16 MXU operands, f32 accumulation, scale folded into the q weights)."""
    B, T, C = x.shape
    md = matmul_dtype
    scale = C ** -0.5
    wq_eff = ((wq.astype(jnp.float32) * scale).astype(md) if fold_scale
              else wq.astype(md))
    k = jnp.einsum("btc,ch->bth", x.astype(md), wk.astype(md),
                   preferred_element_type=jnp.float32)
    q = jnp.einsum("btc,ch->bth", x.astype(md), wq_eff,
                   preferred_element_type=jnp.float32)
    v = jnp.einsum("btc,ch->bth", x.astype(md), wv.astype(md),
                   preferred_element_type=jnp.float32)
    wei = jnp.einsum("bqh,bkh->bqk", q.astype(md), k.astype(md),
                     preferred_element_type=jnp.float32)
    if not fold_scale:
        wei = wei * scale
    mask = jnp.tril(jnp.ones((T, T), dtype=bool))
    wei = jnp.where(mask[None, :, :], wei, -jnp.inf)
    p = jax.nn.softmax(wei, axis=-1)
    return jnp.einsum("bqk,bkh->bqh", p.astype(md), v.astype(md),
                      preferred_element_type=jnp.float32)


if __name__ == "__main__":
    # Small shapes consistent with the module: n_emb=384 fixed, T <= block_size (256).
    B, T = 4, 128
    n_emb = 384          # C (fixed by the module)
    head_size = 64       # H (e.g. n_emb / 6 heads)

    key = jax.random.PRNGKey(0)
    kx, kk, kq, kv = jax.random.split(key, 4)

    # bf16 activations produced at the source (no extra wrapper cast pass).
    x = jax.random.normal(kx, (B, T, n_emb), dtype=jnp.float32).astype(jnp.bfloat16)
    # Deterministic "Linear" weights, stored as (C, H) == PyTorch weight.T.
    wk = jax.random.normal(kk, (n_emb, head_size), dtype=jnp.float32) * (n_emb ** -0.5)
    wq = jax.random.normal(kq, (n_emb, head_size), dtype=jnp.float32) * (n_emb ** -0.5)
    wv = jax.random.normal(kv, (n_emb, head_size), dtype=jnp.float32) * (n_emb ** -0.5)

    # One-time weight prep (fused, lane-aligned, bf16, scale folded into q).
    w_fused = prepare_head_weights(wk, wq, wv)

    out = jax.block_until_ready(head_forward(x, w_fused, head_size))
    assert out.shape == (B, T, head_size)
    assert out.dtype == x.dtype

    # Tight check vs a reference that mirrors the kernel's bf16-MXU / scale-folded numerics.
    ref_bf16 = head_reference(x, wk, wq, wv, matmul_dtype=jnp.bfloat16, fold_scale=True)
    assert jnp.allclose(out.astype(jnp.float32), ref_bf16, atol=2e-2, rtol=2e-2), \
        "mismatch vs bf16-matched reference"

    # Sanity check vs the exact f32 PyTorch-semantics reference (bf16 MXU tolerance).
    ref_f32 = head_reference(x, wk, wq, wv, matmul_dtype=jnp.float32)
    assert jnp.allclose(out.astype(jnp.float32), ref_f32, atol=1e-1, rtol=1e-1), \
        "drifted from f32 reference"

    print("KERNEL_OK")
</pallas_src>

<mosaic_0001>
module attributes {stable_mosaic.version = 11 : i64} {
  func.func @_head_kernel(%arg0: i32, %arg1: memref<1x128x384xbf16, #tpu.memory_space<vmem>>, %arg2: memref<384x384xbf16, #tpu.memory_space<vmem>>, %arg3: memref<1x128x64xbf16, #tpu.memory_space<vmem>>) attributes {dimension_semantics = [#tpu.dimension_semantics<parallel>], iteration_bounds = array<i64: 4>, scalar_prefetch = 0 : i64, scratch_operands = 0 : i64, tpu.core_type = #tpu.core_type<tc>, window_params = [{transform_indices = @transform_0, window_bounds = array<i64: 1, 128, 384>}, {pipeline_mode = #tpu.pipeline_mode<synchronous>, transform_indices = @transform_1, window_bounds = array<i64: 384, 384>}, {transform_indices = @transform_2, window_bounds = array<i64: 1, 128, 64>}]} {
    %c0 = arith.constant 0 : index
    %c0_0 = arith.constant 0 : index
    %c0_1 = arith.constant 0 : index
    %0 = vector.load %arg1[%c0, %c0_0, %c0_1] : memref<1x128x384xbf16, #tpu.memory_space<vmem>>, vector<1x128x384xbf16>
    %c0_2 = arith.constant 0 : index
    %c0_3 = arith.constant 0 : index
    %1 = vector.load %arg2[%c0_2, %c0_3] : memref<384x384xbf16, #tpu.memory_space<vmem>>, vector<384x384xbf16>
    %2 = vector.shape_cast %0 : vector<1x128x384xbf16> to vector<128x384xbf16>
    %cst = arith.constant dense<0.000000e+00> : vector<128x384xf32>
    %3 = tpu.matmul %2, %1, %cst {dimension_numbers = #tpu.dot_dimension_numbers<[1], [0], [0], [1], [0, 0, 1, 1], [], []>} : vector<128x384xbf16>, vector<384x384xbf16>, vector<128x384xf32> -> vector<128x384xf32>
    %4 = vector.extract_strided_slice %3 {offsets = [0, 0], sizes = [128, 128], strides = [1, 1]} : vector<128x384xf32> to vector<128x128xf32>
    %5 = vector.shape_cast %4 : vector<128x128xf32> to vector<1x128x128xf32>
    %6 = arith.truncf %5 : vector<1x128x128xf32> to vector<1x128x128xbf16>
    %7 = vector.extract_strided_slice %3 {offsets = [0, 128], sizes = [128, 128], strides = [1, 1]} : vector<128x384xf32> to vector<128x128xf32>
    %8 = vector.shape_cast %7 : vector<128x128xf32> to vector<1x128x128xf32>
    %9 = arith.truncf %8 : vector<1x128x128xf32> to vector<1x128x128xbf16>
    %10 = vector.extract_strided_slice %3 {offsets = [0, 256], sizes = [128, 64], strides = [1, 1]} : vector<128x384xf32> to vector<128x64xf32>
    %11 = vector.shape_cast %10 : vector<128x64xf32> to vector<1x128x64xf32>
    %12 = arith.truncf %11 : vector<1x128x64xf32> to vector<1x128x64xbf16>
    "tpu.trace_start"() <{level = 10 : i32, message = "bqh,bkh->bqk"}> : () -> ()
    %cst_4 = arith.constant dense<0.000000e+00> : vector<1x128x128xf32>
    %13 = tpu.matmul %9, %6, %cst_4 {dimension_numbers = #tpu.dot_dimension_numbers<[2], [2], [1], [1], [0, 0, 0, 1, 1, 1], [0], [0]>} : vector<1x128x128xbf16>, vector<1x128x128xbf16>, vector<1x128x128xf32> -> vector<1x128x128xf32>
    "tpu.trace_stop"() : () -> ()
    %14 = tpu.iota {dimensions = array<i32: 0>} : vector<128x128xi32>
    %15 = tpu.iota {dimensions = array<i32: 1>} : vector<128x128xi32>
    %16 = arith.cmpi sge, %14, %15 : vector<128x128xi32>
    %17 = vector.shape_cast %16 : vector<128x128xi1> to vector<1x128x128xi1>
    %cst_5 = arith.constant 0xFF800000 : f32
    %18 = vector.broadcast %cst_5 : f32 to vector<1x128x128xf32>
    %19 = arith.select %17, %13, %18 : vector<1x128x128xi1>, vector<1x128x128xf32>
    %cst_6 = arith.constant dense<0xFF800000> : vector<1x128xf32>
    %20 = vector.multi_reduction <maximumf>, %19, %cst_6 [2] : vector<1x128x128xf32> to vector<1x128xf32>
    %21 = vector.shape_cast %20 : vector<1x128xf32> to vector<1x128x1xf32>
    %22 = vector.broadcast %21 : vector<1x128x1xf32> to vector<1x128x128xf32>
    %23 = arith.subf %19, %22 : vector<1x128x128xf32>
    %24 = math.exp %23 : vector<1x128x128xf32>
    %cst_7 = arith.constant dense<0.000000e+00> : vector<1x128xf32>
    %25 = vector.multi_reduction <add>, %24, %cst_7 [2] : vector<1x128x128xf32> to vector<1x128xf32>
    %26 = vector.shape_cast %25 : vector<1x128xf32> to vector<1x128x1xf32>
    %27 = tpu.reciprocal %26 {approx = true} : vector<1x128x1xf32> -> vector<1x128x1xf32>
    %28 = vector.broadcast %27 : vector<1x128x1xf32> to vector<1x128x128xf32>
    %29 = arith.mulf %24, %28 : vector<1x128x128xf32>
    %30 = arith.truncf %29 : vector<1x128x128xf32> to vector<1x128x128xbf16>
    "tpu.trace_start"() <{level = 10 : i32, message = "bqk,bkh->bqh"}> : () -> ()
    %cst_8 = arith.constant dense<0.000000e+00> : vector<1x128x64xf32>
    %31 = tpu.matmul %30, %12, %cst_8 {dimension_numbers = #tpu.dot_dimension_numbers<[2], [1], [1], [2], [0, 0, 0, 1, 1, 2], [0], [0]>} : vector<1x128x128xbf16>, vector<1x128x64xbf16>, vector<1x128x64xf32> -> vector<1x128x64xf32>
    "tpu.trace_stop"() : () -> ()
    %32 = arith.truncf %31 : vector<1x128x64xf32> to vector<1x128x64xbf16>
    %c0_9 = arith.constant 0 : index
    %c0_10 = arith.constant 0 : index
    %c0_11 = arith.constant 0 : index
    %33 = vector.load %arg3[%c0_9, %c0_10, %c0_11] : memref<1x128x64xbf16, #tpu.memory_space<vmem>>, vector<1x128x64xbf16>
    tpu.vector_store %arg3[%c0_9, %c0_10, %c0_11], %32 {strides = array<i32>} : memref<1x128x64xbf16, #tpu.memory_space<vmem>>, vector<1x128x64xbf16>,
    return
  }
  func.func @transform_0(%arg0: i32) -> (i32, i32, i32) {
    %c0_i32 = arith.constant 0 : i32
    %c0_i32_0 = arith.constant 0 : i32
    %c0_i32_1 = arith.constant 0 : i32
    return %arg0, %c0_i32, %c0_i32_0 : i32, i32, i32
  }
  func.func @transform_1(%arg0: i32) -> (i32, i32) {
    %c0_i32 = arith.constant 0 : i32
    %c0_i32_0 = arith.constant 0 : i32
    %c0_i32_1 = arith.constant 0 : i32
    return %c0_i32, %c0_i32_0 : i32, i32
  }
  func.func @transform_2(%arg0: i32) -> (i32, i32, i32) {
    %c0_i32 = arith.constant 0 : i32
    %c0_i32_0 = arith.constant 0 : i32
    %c0_i32_1 = arith.constant 0 : i32
    return %arg0, %c0_i32, %c0_i32_0 : i32, i32, i32
  }
}

</mosaic_0001>

<llo_original>
// kernel: tpu_custom_call.1
$region0: #{tpu_custom_call.1}
  #allocation0 [shape = 'u32[]', space=smem, size = 0x4, offset = 0x4, fixed_abs, tag = 'smem constant byte address 0x4 - core index']
  #allocation1 [shape = 'u32[144,128]{1,0:T(1,128)}', space=vmem, size = 0x12000, scoped, tag = 'internal scratch']
  %s0 = inlined_call_operand.hbm [shape: bf16[4,128,384], index: 0, kind: input, shape index: {}]
  %s1 = inlined_call_operand.hbm [shape: bf16[384,384], index: 1, kind: input, shape index: {}]
  %s2 = inlined_call_operand.vmem [shape: bf16[4,128,64], index: 2, kind: output, shape index: {}]
  %s3 = sld [smem:[#allocation0]]
  $region49: #{tpu_custom_call.1} parent=0
    _
  %s5 = ssub.s32 1, %s3
  %s6 = scalar_select 0, %s5, %s3
  $region1: #{tpu_custom_call.1} parent=0
    #allocation2 [shape = 'u8[196608]{0}', space=vmem, size = 0x30000, scoped, tag = 'input window, operand 0']
    #allocation3 [shape = 's32[2]{0}', space=sflag, size = 0x8, scoped, tag = 'scoped memory for tpu_custom_call.1']
    #allocation4 [shape = 'u8[294912]{0}', space=vmem, size = 0x48000, scoped, tag = 'input window, operand 1, single buffered']
    #allocation5 [shape = 's32[1]{0}', space=sflag, size = 0x4, scoped, tag = 'scoped memory for tpu_custom_call.1']
    %7 = vsyncpa [#allocation3], 0
    %s8 = scalar_lea.sflag [#allocation3], 1
    %9 = vsyncpa %s8, 0
    %10 = vsyncpa [#allocation5], 0
    loop: start=0, step=1, limit=6
    $region2: #{tpu_custom_call.1} parent=1 // loop_pre_header
      _
    $region3: #{tpu_custom_call.1} parent=1 // loop_header
      %s12 = sphi 0, %s16
      %p13 = scmp.ge.s32.totalorder %s12, 6
      %s22 = sphi 0, %s24
      %s25 = sphi 0, %s22
      %s26 = sphi 0, %s25
      %s42 = sphi 0, %s26
      %s46 = sphi 0, %s46
      %s48 = sphi 0, %s46
      %s49 = sphi 0, %s48
      %s63 = sphi 0, %s49
      %s69 = sphi 0, %s71
      %s72 = sphi 0, %s69
      %s73 = sphi 0, %s72
      %s89 = sphi 0, %s73
    $region4: #{tpu_custom_call.1} parent=1 // loop_header_branch
      %15 = sbr.rel (%p13) target = $region8
    $region5: #{tpu_custom_call.1} parent=1 // loop_body
      %s17 = ssub.s32 %s12, 1
      %s18 = ssub.s32 %s12, 2
      %s19 = sadd.s32 %s12, 1
      %s20 = ssub.s32 %s12, %s19
      %p21 = scmp.eq.s32.totalorder %s20, 0
      %s23 = sadd.s32 %s22, 1
      %s24 = scalar_select %p21, %s22, %s23
      %p27 = pneg %p21
      %p28 = scmp.eq.s32.totalorder %s12, 3
      %p29 = por %p27, %p28
      %p30 = scmp.ne.s32.totalorder %s22, %s25
      %p31 = scmp.eq.s32.totalorder %s12, 0
      %p32 = por %p30, %p31
      %p33 = scmp.ne.s32.totalorder %s22, %s25
      %p34 = scmp.eq.s32.totalorder %s17, 3
      %p35 = por %p33, %p34
      %p36 = scmp.ne.s32.totalorder %s25, %s26
      %p37 = scmp.eq.s32.totalorder %s17, 0
      %p38 = por %p36, %p37
      %p39 = scmp.ne.s32.totalorder %s25, %s26
      %p40 = scmp.eq.s32.totalorder %s18, 3
      %p41 = por %p39, %p40
      %p43 = scmp.ne.s32.totalorder %s26, %s42
      %p44 = scmp.eq.s32.totalorder %s18, 0
      %p45 = por %p43, %p44
      %s47 = sadd.s32 %s46, 1
      %p50 = scmp.eq.s32.totalorder %s12, 3
      %p51 = scmp.ne.s32.totalorder %s46, %s48
      %p52 = scmp.eq.s32.totalorder %s12, 0
      %p53 = por %p51, %p52
      %p54 = scmp.ne.s32.totalorder %s46, %s48
      %p55 = scmp.eq.s32.totalorder %s17, 3
      %p56 = por %p54, %p55
      %p57 = scmp.ne.s32.totalorder %s48, %s49
      %p58 = scmp.eq.s32.totalorder %s17, 0
      %p59 = por %p57, %p58
      %p60 = scmp.ne.s32.totalorder %s48, %s49
      %p61 = scmp.eq.s32.totalorder %s18, 3
      %p62 = por %p60, %p61
      %p64 = scmp.ne.s32.totalorder %s49, %s63
      %p65 = scmp.eq.s32.totalorder %s18, 0
      %p66 = por %p64, %p65
      %s67 = ssub.s32 %s12, %s19
      %p68 = scmp.eq.s32.totalorder %s67, 0
      %s70 = sadd.s32 %s69, 1
      %s71 = scalar_select %p68, %s69, %s70
      %p74 = pneg %p68
      %p75 = scmp.eq.s32.totalorder %s12, 3
      %p76 = por %p74, %p75
      %p77 = scmp.ne.s32.totalorder %s69, %s72
      %p78 = scmp.eq.s32.totalorder %s12, 0
      %p79 = por %p77, %p78
      %p80 = scmp.ne.s32.totalorder %s69, %s72
      %p81 = scmp.eq.s32.totalorder %s17, 3
      %p82 = por %p80, %p81
      %p83 = scmp.ne.s32.totalorder %s72, %s73
      %p84 = scmp.eq.s32.totalorder %s17, 0
      %p85 = por %p83, %p84
      %p86 = scmp.ne.s32.totalorder %s72, %s73
      %p87 = scmp.eq.s32.totalorder %s18, 3
      %p88 = por %p86, %p87
      %p90 = scmp.ne.s32.totalorder %s73, %s89
      %p91 = scmp.eq.s32.totalorder %s18, 0
      %p92 = por %p90, %p91
      %p93 = scmp.le.s32.totalorder 1, %s12
      %p94 = scmp.lt.s32.totalorder %s12, 5
      %p95 = pnand %p93, %p94
      %p96 = pneg %p95
      // Predicated region
      $region9: #{tpu_custom_call.1} parent=5 // pred_check
        _
      $region10: #{tpu_custom_call.1} parent=5 // pred_check_branch
        %98 = sbr.rel (%p95) target = $region12
      $region11: #{tpu_custom_call.1} parent=5 // pred_region
        %s99 = ssub.s32 %s12, 1
        // Predicated region
        $region13: #{tpu_custom_call.1} parent=11 // pred_check
          %p100 = pneg %p59
        $region14: #{tpu_custom_call.1} parent=11 // pred_check_branch
          %102 = sbr.rel (%p100) target = $region16
        $region15: #{tpu_custom_call.1} parent=11 // pred_region
          %s104 = ssub.s32 9216, 9216
          %105 = vsyncadd [#allocation5], %s104
          %s106 = sshll.u32 [#allocation4], 4
          %s107 = int_to_ptr.vmem [resolvable:$true] %s106
          %112 = dma.hbm_to_vmem [thread:$0]  %s1, 9216, %s107, [#allocation5], 192, 192, 12
        $region16: #{tpu_custom_call.1} parent=11 // pred_fallthru
          _
      $region12: #{tpu_custom_call.1} parent=5 // pred_fallthru
        _
      %p113 = scmp.lt.s32.totalorder %s12, 4
      // Predicated region
      $region17: #{tpu_custom_call.1} parent=5 // pred_check
        %p114 = pneg %p113
      $region18: #{tpu_custom_call.1} parent=5 // pred_check_branch
        %116 = sbr.rel (%p114) target = $region20
      $region19: #{tpu_custom_call.1} parent=5 // pred_region
        // Predicated region
        $region21: #{tpu_custom_call.1} parent=19 // pred_check
          %p117 = pneg %p32
        $region22: #{tpu_custom_call.1} parent=19 // pred_check_branch
          %119 = sbr.rel (%p117) target = $region24
        $region23: #{tpu_custom_call.1} parent=19 // pred_region
          %s120 = sand.u32 %s22, 1
          %s121 = scalar_lea.sflag [#allocation3], %s120
          %s122 = sand.u32 %s22, 1
          %s123 = smul.addr %s122, 192
          %s124 = scalar_lea.vmem [#allocation2], %s123
          %s126 = ssub.s32 3072, 3072
          %127 = vsyncadd %s121, %s126
          %s128 = smul.addr %s12, 48
          %s129 = smul.addr %s128, 64
          %s130 = scalar_lea.hbm %s0, %s129
          %s131 = sshll.u32 %s124, 4
          %s132 = int_to_ptr.vmem [resolvable:$true] %s131
          %137 = dma.hbm_to_vmem [thread:$0]  %s130, 3072, %s132, %s121, 192, 192, 12
        $region24: #{tpu_custom_call.1} parent=19 // pred_fallthru
          _
      $region20: #{tpu_custom_call.1} parent=5 // pred_fallthru
        _
      %p138 = scmp.le.s32.totalorder 1, %s12
      %p139 = scmp.lt.s32.totalorder %s12, 5
      %p140 = pnand %p138, %p139
      %p141 = pneg %p140
      // Predicated region
      $region25: #{tpu_custom_call.1} parent=5 // pred_check
        _
      $region26: #{tpu_custom_call.1} parent=5 // pred_check_branch
        %143 = sbr.rel (%p140) target = $region28
      $region27: #{tpu_custom_call.1} parent=5 // pred_region
        %s144 = ssub.s32 %s12, 1
        %s145 = sand.u32 %s25, 1
        %s146 = scalar_lea.sflag [#allocation3], %s145
        %s147 = sand.u32 %s25, 1
        %s148 = smul.addr %s147, 192
        %s149 = scalar_lea.vmem [#allocation2], %s148
        // Predicated region
        $region29: #{tpu_custom_call.1} parent=27 // pred_check
          %p150 = pneg %p38
        $region30: #{tpu_custom_call.1} parent=27 // pred_check_branch
          %152 = sbr.rel (%p150) target = $region32
        $region31: #{tpu_custom_call.1} parent=27 // pred_region
          %153 = dma.done %s146, 3072
        $region32: #{tpu_custom_call.1} parent=27 // pred_fallthru
          _
        // Predicated region
        $region33: #{tpu_custom_call.1} parent=27 // pred_check
          %p154 = pneg %p59
        $region34: #{tpu_custom_call.1} parent=27 // pred_check_branch
          %156 = sbr.rel (%p154) target = $region36
        $region35: #{tpu_custom_call.1} parent=27 // pred_region
          %157 = dma.done [#allocation5], 9216
        $region36: #{tpu_custom_call.1} parent=27 // pred_fallthru
          _
        %s158 = sand.u32 %s25, 1
        %s159 = scalar_lea.sflag [#allocation3], %s158
        %s160 = sand.u32 %s25, 1
        %s161 = smul.addr %s160, 192
        %s162 = scalar_lea.vmem [#allocation2], %s161
        %p163 = pneg %p38
        %p164 = pneg %p35
        %p165 = pneg %p59
        %p166 = pneg %p56
        %p167 = pneg %p85
        %p168 = pneg %p82
        %p169 = scmp.lt.s32.totalorder %s17, 3
        %s170 = scalar_select %p169, %s17, 3
        %s171 = smul.addr %s170, 16
        %s172 = smul.addr %s171, 4
        %s173 = scalar_lea.vmem %s2, %s172
        %p174 = scmp.lt.s32.totalorder %s17, 3
        %s175 = scalar_select %p174, %s17, 3
        %s176 = smul.addr %s175, 16
        %s177 = smul.addr %s176, 4
        %s178 = scalar_lea.vmem %s2, %s177
        %v180 = vld [vmem:[%s149] sm:$0xff]
        %v181 = vld [vmem:[%s149 + $0x8] sm:$0xf]
        %v182 = vld [vmem:[%s149 + $0xc] sm:$0xff]
        %v183 = vld [vmem:[%s149 + $0x14] sm:$0xf]
        %v184 = vld [vmem:[%s149 + $0x18] sm:$0xff]
        %v185 = vld [vmem:[%s149 + $0x20] sm:$0xf]
        %v186 = vld [vmem:[%s149 + $0x24] sm:$0xff]
        %v187 = vld [vmem:[%s149 + $0x2c] sm:$0xf]
        %v188 = vld [vmem:[%s149 + $0x30] sm:$0xff]
        %v189 = vld [vmem:[%s149 + $0x38] sm:$0xf]
        %v190 = vld [vmem:[%s149 + $0x3c] sm:$0xff]
        %v191 = vld [vmem:[%s149 + $0x44] sm:$0xf]
        %v192 = vld [vmem:[%s149 + $0x48] sm:$0xff]
        %v193 = vld [vmem:[%s149 + $0x50] sm:$0xf]
        %v194 = vld [vmem:[%s149 + $0x54] sm:$0xff]
        %v195 = vld [vmem:[%s149 + $0x5c] sm:$0xf]
        %v196 = vld [vmem:[%s149 + $0x60] sm:$0xff]
        %v197 = vld [vmem:[%s149 + $0x68] sm:$0xf]
        %v198 = vld [vmem:[%s149 + $0x6c] sm:$0xff]
        %v199 = vld [vmem:[%s149 + $0x74] sm:$0xf]
        %v200 = vld [vmem:[%s149 + $0x78] sm:$0xff]
        %v201 = vld [vmem:[%s149 + $0x80] sm:$0xf]
        %v202 = vld [vmem:[%s149 + $0x84] sm:$0xff]
        %v203 = vld [vmem:[%s149 + $0x8c] sm:$0xf]
        %v204 = vld [vmem:[%s149 + $0x90] sm:$0xff]
        %v205 = vld [vmem:[%s149 + $0x98] sm:$0xf]
        %v206 = vld [vmem:[%s149 + $0x9c] sm:$0xff]
        %v207 = vld [vmem:[%s149 + $0xa4] sm:$0xf]
        %v208 = vld [vmem:[%s149 + $0xa8] sm:$0xff]
        %v209 = vld [vmem:[%s149 + $0xb0] sm:$0xf]
        %v210 = vld [vmem:[%s149 + $0xb4] sm:$0xff]
        %v211 = vld [vmem:[%s149 + $0xbc] sm:$0xf]
        %v212 = vld [vmem:[#allocation4] sm:$0xff]
        %v213 = vld [vmem:[#allocation4 + $0x8] sm:$0xf]
        %v214 = vld [vmem:[#allocation4 + $0xc] sm:$0xff]
        %v215 = vld [vmem:[#allocation4 + $0x14] sm:$0xf]
        %v216 = vld [vmem:[#allocation4 + $0x18] sm:$0xff]
        %v217 = vld [vmem:[#allocation4 + $0x20] sm:$0xf]
        %v218 = vld [vmem:[#allocation4 + $0x24] sm:$0xff]
        %v219 = vld [vmem:[#allocation4 + $0x2c] sm:$0xf]
        %v220 = vld [vmem:[#allocation4 + $0x30] sm:$0xff]
        %v221 = vld [vmem:[#allocation4 + $0x38] sm:$0xf]
        %v222 = vld [vmem:[#allocation4 + $0x3c] sm:$0xff]
        %v223 = vld [vmem:[#allocation4 + $0x44] sm:$0xf]
        %v224 = vld [vmem:[#allocation4 + $0x48] sm:$0xff]
        %v225 = vld [vmem:[#allocation4 + $0x50] sm:$0xf]
        %v226 = vld [vmem:[#allocation4 + $0x54] sm:$0xff]
        %v227 = vld [vmem:[#allocation4 + $0x5c] sm:$0xf]
        %v228 = vld [vmem:[#allocation4 + $0x60] sm:$0xff]
        %v229 = vld [vmem:[#allocation4 + $0x68] sm:$0xf]
        %v230 = vld [vmem:[#allocation4 + $0x6c] sm:$0xff]
        %v231 = vld [vmem:[#allocation4 + $0x74] sm:$0xf]
        %v232 = vld [vmem:[#allocation4 + $0x78] sm:$0xff]
        %v233 = vld [vmem:[#allocation4 + $0x80] sm:$0xf]
        %v234 = vld [vmem:[#allocation4 + $0x84] sm:$0xff]
        %v235 = vld [vmem:[#allocation4 + $0x8c] sm:$0xf]
        %v236 = vld [vmem:[#allocation4 + $0x90] sm:$0xff]
        %v237 = vld [vmem:[#allocation4 + $0x98] sm:$0xf]
        %v238 = vld [vmem:[#allocation4 + $0x9c] sm:$0xff]
        %v239 = vld [vmem:[#allocation4 + $0xa4] sm:$0xf]
        %v240 = vld [vmem:[#allocation4 + $0xa8] sm:$0xff]
        %v241 = vld [vmem:[#allocation4 + $0xb0] sm:$0xf]
        %v242 = vld [vmem:[#allocation4 + $0xb4] sm:$0xff]
        %v243 = vld [vmem:[#allocation4 + $0xbc] sm:$0xf]
        %v244 = vld [vmem:[#allocation4 + $0xc0] sm:$0xff]
        %v245 = vld [vmem:[#allocation4 + $0xc8] sm:$0xf]
        %v246 = vld [vmem:[#allocation4 + $0xcc] sm:$0xff]
        %v247 = vld [vmem:[#allocation4 + $0xd4] sm:$0xf]
        %v248 = vld [vmem:[#allocation4 + $0xd8] sm:$0xff]
        %v249 = vld [vmem:[#allocation4 + $0xe0] sm:$0xf]
        %v250 = vld [vmem:[#allocation4 + $0xe4] sm:$0xff]
        %v251 = vld [vmem:[#allocation4 + $0xec] sm:$0xf]
        %v252 = vld [vmem:[#allocation4 + $0xf0] sm:$0xff]
        %v253 = vld [vmem:[#allocation4 + $0xf8] sm:$0xf]
        %v254 = vld [vmem:[#allocation4 + $0xfc] sm:$0xff]
        %v255 = vld [vmem:[#allocation4 + $0x104] sm:$0xf]
        %v256 = vld [vmem:[#allocation4 + $0x108] sm:$0xff]
        %v257 = vld [vmem:[#allocation4 + $0x110] sm:$0xf]
        %v258 = vld [vmem:[#allocation4 + $0x114] sm:$0xff]
        %v259 = vld [vmem:[#allocation4 + $0x11c] sm:$0xf]
        %v260 = vld [vmem:[#allocation4 + $0x120] sm:$0xff]
        %v261 = vld [vmem:[#allocation4 + $0x128] sm:$0xf]
        %v262 = vld [vmem:[#allocation4 + $0x12c] sm:$0xff]
        %v263 = vld [vmem:[#allocation4 + $0x134] sm:$0xf]
        %v264 = vld [vmem:[#allocation4 + $0x138] sm:$0xff]
        %v265 = vld [vmem:[#allocation4 + $0x140] sm:$0xf]
        %v266 = vld [vmem:[#allocation4 + $0x144] sm:$0xff]
        %v267 = vld [vmem:[#allocation4 + $0x14c] sm:$0xf]
        %v268 = vld [vmem:[#allocation4 + $0x150] sm:$0xff]
        %v269 = vld [vmem:[#allocation4 + $0x158] sm:$0xf]
        %v270 = vld [vmem:[#allocation4 + $0x15c] sm:$0xff]
        %v271 = vld [vmem:[#allocation4 + $0x164] sm:$0xf]
        %v272 = vld [vmem:[#allocation4 + $0x168] sm:$0xff]
        %v273 = vld [vmem:[#allocation4 + $0x170] sm:$0xf]
        %v274 = vld [vmem:[#allocation4 + $0x174] sm:$0xff]
        %v275 = vld [vmem:[#allocation4 + $0x17c] sm:$0xf]
        %v276 = vld [vmem:[#allocation4 + $0x180] sm:$0xff]
        %v277 = vld [vmem:[#allocation4 + $0x188] sm:$0xf]
        %v278 = vld [vmem:[#allocation4 + $0x18c] sm:$0xff]
        %v279 = vld [vmem:[#allocation4 + $0x194] sm:$0xf]
        %v280 = vld [vmem:[#allocation4 + $0x198] sm:$0xff]
        %v281 = vld [vmem:[#allocation4 + $0x1a0] sm:$0xf]
        %v282 = vld [vmem:[#allocation4 + $0x1a4] sm:$0xff]
        %v283 = vld [vmem:[#allocation4 + $0x1ac] sm:$0xf]
        %v284 = vld [vmem:[#allocation4 + $0x1b0] sm:$0xff]
        %v285 = vld [vmem:[#allocation4 + $0x1b8] sm:$0xf]
        %v286 = vld [vmem:[#allocation4 + $0x1bc] sm:$0xff]
        %v287 = vld [vmem:[#allocation4 + $0x1c4] sm:$0xf]
        %v288 = vld [vmem:[#allocation4 + $0x1c8] sm:$0xff]
        %v289 = vld [vmem:[#allocation4 + $0x1d0] sm:$0xf]
        %v290 = vld [vmem:[#allocation4 + $0x1d4] sm:$0xff]
        %v291 = vld [vmem:[#allocation4 + $0x1dc] sm:$0xf]
        %v292 = vld [vmem:[#allocation4 + $0x1e0] sm:$0xff]
        %v293 = vld [vmem:[#allocation4 + $0x1e8] sm:$0xf]
        %v294 = vld [vmem:[#allocation4 + $0x1ec] sm:$0xff]
        %v295 = vld [vmem:[#allocation4 + $0x1f4] sm:$0xf]
        %v296 = vld [vmem:[#allocation4 + $0x1f8] sm:$0xff]
        %v297 = vld [vmem:[#allocation4 + $0x200] sm:$0xf]
        %v298 = vld [vmem:[#allocation4 + $0x204] sm:$0xff]
        %v299 = vld [vmem:[#allocation4 + $0x20c] sm:$0xf]
        %v300 = vld [vmem:[#allocation4 + $0x210] sm:$0xff]
        %v301 = vld [vmem:[#allocation4 + $0x218] sm:$0xf]
        %v302 = vld [vmem:[#allocation4 + $0x21c] sm:$0xff]
        %v303 = vld [vmem:[#allocation4 + $0x224] sm:$0xf]
        %v304 = vld [vmem:[#allocation4 + $0x228] sm:$0xff]
        %v305 = vld [vmem:[#allocation4 + $0x230] sm:$0xf]
        %v306 = vld [vmem:[#allocation4 + $0x234] sm:$0xff]
        %v307 = vld [vmem:[#allocation4 + $0x23c] sm:$0xf]
        %v340 = vunpack.c.l.b16 %v180
        %v341 = vunpack.c.h.b16 %v180
        %v342 = vunpack.c.l.b16 %v181
        %v343 = vunpack.c.l.b16 %v182
        %v344 = vunpack.c.h.b16 %v182
        %v345 = vunpack.c.l.b16 %v183
        %v346 = vunpack.c.l.b16 %v184
        %v347 = vunpack.c.h.b16 %v184
        %v348 = vunpack.c.l.b16 %v185
        %v349 = vunpack.c.l.b16 %v186
        %v350 = vunpack.c.h.b16 %v186
        %v351 = vunpack.c.l.b16 %v187
        %v352 = vunpack.c.l.b16 %v188
        %v353 = vunpack.c.h.b16 %v188
        %v354 = vunpack.c.l.b16 %v189
        %v355 = vunpack.c.l.b16 %v190
        %v356 = vunpack.c.h.b16 %v190
        %v357 = vunpack.c.l.b16 %v191
        %v358 = vunpack.c.l.b16 %v192
        %v359 = vunpack.c.h.b16 %v192
        %v360 = vunpack.c.l.b16 %v193
        %v361 = vunpack.c.l.b16 %v194
        %v362 = vunpack.c.h.b16 %v194
        %v363 = vunpack.c.l.b16 %v195
        %v364 = vunpack.c.l.b16 %v196
        %v365 = vunpack.c.h.b16 %v196
        %v366 = vunpack.c.l.b16 %v197
        %v367 = vunpack.c.l.b16 %v198
        %v368 = vunpack.c.h.b16 %v198
        %v369 = vunpack.c.l.b16 %v199
        %v370 = vunpack.c.l.b16 %v200
        %v371 = vunpack.c.h.b16 %v200
        %v372 = vunpack.c.l.b16 %v201
        %v373 = vunpack.c.l.b16 %v202
        %v374 = vunpack.c.h.b16 %v202
        %v375 = vunpack.c.l.b16 %v203
        %v376 = vunpack.c.l.b16 %v204
        %v377 = vunpack.c.h.b16 %v204
        %v378 = vunpack.c.l.b16 %v205
        %v379 = vunpack.c.l.b16 %v206
        %v380 = vunpack.c.h.b16 %v206
        %v381 = vunpack.c.l.b16 %v207
        %v382 = vunpack.c.l.b16 %v208
        %v383 = vunpack.c.h.b16 %v208
        %v384 = vunpack.c.l.b16 %v209
        %v385 = vunpack.c.l.b16 %v210
        %v386 = vunpack.c.h.b16 %v210
        %v387 = vunpack.c.l.b16 %v211
        %v388 = vpack.c.b16 %v343, %v340
        %v389 = vpack.c.b16 %v344, %v341
        %v390 = vpack.c.b16 %v345, %v342
        %v391 = vpack.c.b16 %v349, %v346
        %v392 = vpack.c.b16 %v350, %v347
        %v393 = vpack.c.b16 %v351, %v348
        %v394 = vpack.c.b16 %v355, %v352
        %v395 = vpack.c.b16 %v356, %v353
        %v396 = vpack.c.b16 %v357, %v354
        %v397 = vpack.c.b16 %v361, %v358
        %v398 = vpack.c.b16 %v362, %v359
        %v399 = vpack.c.b16 %v363, %v360
        %v400 = vpack.c.b16 %v367, %v364
        %v401 = vpack.c.b16 %v368, %v365
        %v402 = vpack.c.b16 %v369, %v366
        %v403 = vpack.c.b16 %v373, %v370
        %v404 = vpack.c.b16 %v374, %v371
        %v405 = vpack.c.b16 %v375, %v372
        %v406 = vpack.c.b16 %v379, %v376
        %v407 = vpack.c.b16 %v380, %v377
        %v408 = vpack.c.b16 %v381, %v378
        %v409 = vpack.c.b16 %v385, %v382
        %v410 = vpack.c.b16 %v386, %v383
        %v411 = vpack.c.b16 %v387, %v384
        %v532 = vunpack.c.l.b16 %v212
        %v533 = vunpack.c.h.b16 %v212
        %v534 = vunpack.c.l.b16 %v213
        %v535 = vunpack.c.l.b16 %v214
        %v536 = vunpack.c.h.b16 %v214
        %v537 = vunpack.c.l.b16 %v215
        %v538 = vunpack.c.l.b16 %v216
        %v539 = vunpack.c.h.b16 %v216
        %v540 = vunpack.c.l.b16 %v217
        %v541 = vunpack.c.l.b16 %v218
        %v542 = vunpack.c.h.b16 %v218
        %v543 = vunpack.c.l.b16 %v219
        %v544 = vunpack.c.l.b16 %v220
        %v545 = vunpack.c.h.b16 %v220
        %v546 = vunpack.c.l.b16 %v221
        %v547 = vunpack.c.l.b16 %v222
        %v548 = vunpack.c.h.b16 %v222
        %v549 = vunpack.c.l.b16 %v223
        %v550 = vunpack.c.l.b16 %v224
        %v551 = vunpack.c.h.b16 %v224
        %v552 = vunpack.c.l.b16 %v225
        %v553 = vunpack.c.l.b16 %v226
        %v554 = vunpack.c.h.b16 %v226
        %v555 = vunpack.c.l.b16 %v227
        %v556 = vunpack.c.l.b16 %v228
        %v557 = vunpack.c.h.b16 %v228
        %v558 = vunpack.c.l.b16 %v229
        %v559 = vunpack.c.l.b16 %v230
        %v560 = vunpack.c.h.b16 %v230
        %v561 = vunpack.c.l.b16 %v231
        %v562 = vunpack.c.l.b16 %v232
        %v563 = vunpack.c.h.b16 %v232
        %v564 = vunpack.c.l.b16 %v233
        %v565 = vunpack.c.l.b16 %v234
        %v566 = vunpack.c.h.b16 %v234
        %v567 = vunpack.c.l.b16 %v235
        %v568 = vunpack.c.l.b16 %v236
        %v569 = vunpack.c.h.b16 %v236
        %v570 = vunpack.c.l.b16 %v237
        %v571 = vunpack.c.l.b16 %v238
        %v572 = vunpack.c.h.b16 %v238
        %v573 = vunpack.c.l.b16 %v239
        %v574 = vunpack.c.l.b16 %v240
        %v575 = vunpack.c.h.b16 %v240
        %v576 = vunpack.c.l.b16 %v241
        %v577 = vunpack.c.l.b16 %v242
        %v578 = vunpack.c.h.b16 %v242
        %v579 = vunpack.c.l.b16 %v243
        %v580 = vunpack.c.l.b16 %v244
        %v581 = vunpack.c.h.b16 %v244
        %v582 = vunpack.c.l.b16 %v245
        %v583 = vunpack.c.l.b16 %v246
        %v584 = vunpack.c.h.b16 %v246
        %v585 = vunpack.c.l.b16 %v247
        %v586 = vunpack.c.l.b16 %v248
        %v587 = vunpack.c.h.b16 %v248
        %v588 = vunpack.c.l.b16 %v249
        %v589 = vunpack.c.l.b16 %v250
        %v590 = vunpack.c.h.b16 %v250
        %v591 = vunpack.c.l.b16 %v251
        %v592 = vunpack.c.l.b16 %v252
        %v593 = vunpack.c.h.b16 %v252
        %v594 = vunpack.c.l.b16 %v253
        %v595 = vunpack.c.l.b16 %v254
        %v596 = vunpack.c.h.b16 %v254
        %v597 = vunpack.c.l.b16 %v255
        %v598 = vunpack.c.l.b16 %v256
        %v599 = vunpack.c.h.b16 %v256
        %v600 = vunpack.c.l.b16 %v257
        %v601 = vunpack.c.l.b16 %v258
        %v602 = vunpack.c.h.b16 %v258
        %v603 = vunpack.c.l.b16 %v259
        %v604 = vunpack.c.l.b16 %v260
        %v605 = vunpack.c.h.b16 %v260
        %v606 = vunpack.c.l.b16 %v261
        %v607 = vunpack.c.l.b16 %v262
        %v608 = vunpack.c.h.b16 %v262
        %v609 = vunpack.c.l.b16 %v263
        %v610 = vunpack.c.l.b16 %v264
        %v611 = vunpack.c.h.b16 %v264
        %v612 = vunpack.c.l.b16 %v265
        %v613 = vunpack.c.l.b16 %v266
        %v614 = vunpack.c.h.b16 %v266
        %v615 = vunpack.c.l.b16 %v267
        %v616 = vunpack.c.l.b16 %v268
        %v617 = vunpack.c.h.b16 %v268
        %v618 = vunpack.c.l.b16 %v269
        %v619 = vunpack.c.l.b16 %v270
        %v620 = vunpack.c.h.b16 %v270
        %v621 = vunpack.c.l.b16 %v271
        %v622 = vunpack.c.l.b16 %v272
        %v623 = vunpack.c.h.b16 %v272
        %v624 = vunpack.c.l.b16 %v273
        %v625 = vunpack.c.l.b16 %v274
        %v626 = vunpack.c.h.b16 %v274
        %v627 = vunpack.c.l.b16 %v275
        %v628 = vunpack.c.l.b16 %v276
        %v629 = vunpack.c.h.b16 %v276
        %v630 = vunpack.c.l.b16 %v277
        %v631 = vunpack.c.l.b16 %v278
        %v632 = vunpack.c.h.b16 %v278
        %v633 = vunpack.c.l.b16 %v279
        %v634 = vunpack.c.l.b16 %v280
        %v635 = vunpack.c.h.b16 %v280
        %v636 = vunpack.c.l.b16 %v281
        %v637 = vunpack.c.l.b16 %v282
        %v638 = vunpack.c.h.b16 %v282
        %v639 = vunpack.c.l.b16 %v283
        %v640 = vunpack.c.l.b16 %v284
        %v641 = vunpack.c.h.b16 %v284
        %v642 = vunpack.c.l.b16 %v285
        %v643 = vunpack.c.l.b16 %v286
        %v644 = vunpack.c.h.b16 %v286
        %v645 = vunpack.c.l.b16 %v287
        %v646 = vunpack.c.l.b16 %v288
        %v647 = vunpack.c.h.b16 %v288
        %v648 = vunpack.c.l.b16 %v289
        %v649 = vunpack.c.l.b16 %v290
        %v650 = vunpack.c.h.b16 %v290
        %v651 = vunpack.c.l.b16 %v291
        %v652 = vunpack.c.l.b16 %v292
        %v653 = vunpack.c.h.b16 %v292
        %v654 = vunpack.c.l.b16 %v293
        %v655 = vunpack.c.l.b16 %v294
        %v656 = vunpack.c.h.b16 %v294
        %v657 = vunpack.c.l.b16 %v295
        %v658 = vunpack.c.l.b16 %v296
        %v659 = vunpack.c.h.b16 %v296
        %v660 = vunpack.c.l.b16 %v297
        %v661 = vunpack.c.l.b16 %v298
        %v662 = vunpack.c.h.b16 %v298
        %v663 = vunpack.c.l.b16 %v299
        %v664 = vunpack.c.l.b16 %v300
        %v665 = vunpack.c.h.b16 %v300
        %v666 = vunpack.c.l.b16 %v301
        %v667 = vunpack.c.l.b16 %v302
        %v668 = vunpack.c.h.b16 %v302
        %v669 = vunpack.c.l.b16 %v303
        %v670 = vunpack.c.l.b16 %v304
        %v671 = vunpack.c.h.b16 %v304
        %v672 = vunpack.c.l.b16 %v305
        %v673 = vunpack.c.l.b16 %v306
        %v674 = vunpack.c.h.b16 %v306
        %v675 = vunpack.c.l.b16 %v307
        %v676 = vpack.c.b16 %v535, %v532
        %v677 = vpack.c.b16 %v536, %v533
        %v678 = vpack.c.b16 %v537, %v534
        %v679 = vpack.c.b16 %v541, %v538
        %v680 = vpack.c.b16 %v542, %v539
        %v681 = vpack.c.b16 %v543, %v540
        %v682 = vpack.c.b16 %v547, %v544
        %v683 = vpack.c.b16 %v548, %v545
        %v684 = vpack.c.b16 %v549, %v546
        %v685 = vpack.c.b16 %v553, %v550
        %v686 = vpack.c.b16 %v554, %v551
        %v687 = vpack.c.b16 %v555, %v552
        %v688 = vpack.c.b16 %v559, %v556
        %v689 = vpack.c.b16 %v560, %v557
        %v690 = vpack.c.b16 %v561, %v558
        %v691 = vpack.c.b16 %v565, %v562
        %v692 = vpack.c.b16 %v566, %v563
        %v693 = vpack.c.b16 %v567, %v564
        %v694 = vpack.c.b16 %v571, %v568
        %v695 = vpack.c.b16 %v572, %v569
        %v696 = vpack.c.b16 %v573, %v570
        %v697 = vpack.c.b16 %v577, %v574
        %v698 = vpack.c.b16 %v578, %v575
        %v699 = vpack.c.b16 %v579, %v576
        %v700 = vpack.c.b16 %v583, %v580
        %v701 = vpack.c.b16 %v584, %v581
        %v702 = vpack.c.b16 %v585, %v582
        %v703 = vpack.c.b16 %v589, %v586
        %v704 = vpack.c.b16 %v590, %v587
        %v705 = vpack.c.b16 %v591, %v588
        %v706 = vpack.c.b16 %v595, %v592
        %v707 = vpack.c.b16 %v596, %v593
        %v708 = vpack.c.b16 %v597, %v594
        %v709 = vpack.c.b16 %v601, %v598
        %v710 = vpack.c.b16 %v602, %v599
        %v711 = vpack.c.b16 %v603, %v600
        %v712 = vpack.c.b16 %v607, %v604
        %v713 = vpack.c.b16 %v608, %v605
        %v714 = vpack.c.b16 %v609, %v606
        %v715 = vpack.c.b16 %v613, %v610
        %v716 = vpack.c.b16 %v614, %v611
        %v717 = vpack.c.b16 %v615, %v612
        %v718 = vpack.c.b16 %v619, %v616
        %v719 = vpack.c.b16 %v620, %v617
        %v720 = vpack.c.b16 %v621, %v618
        %v721 = vpack.c.b16 %v625, %v622
        %v722 = vpack.c.b16 %v626, %v623
        %v723 = vpack.c.b16 %v627, %v624
        %v724 = vpack.c.b16 %v631, %v628
        %v725 = vpack.c.b16 %v632, %v629
        %v726 = vpack.c.b16 %v633, %v630
        %v727 = vpack.c.b16 %v637, %v634
        %v728 = vpack.c.b16 %v638, %v635
        %v729 = vpack.c.b16 %v639, %v636
        %v730 = vpack.c.b16 %v643, %v640
        %v731 = vpack.c.b16 %v644, %v641
        %v732 = vpack.c.b16 %v645, %v642
        %v733 = vpack.c.b16 %v649, %v646
        %v734 = vpack.c.b16 %v650, %v647
        %v735 = vpack.c.b16 %v651, %v648
        %v736 = vpack.c.b16 %v655, %v652
        %v737 = vpack.c.b16 %v656, %v653
        %v738 = vpack.c.b16 %v657, %v654
        %v739 = vpack.c.b16 %v661, %v658
        %v740 = vpack.c.b16 %v662, %v659
        %v741 = vpack.c.b16 %v663, %v660
        %v742 = vpack.c.b16 %v667, %v664
        %v743 = vpack.c.b16 %v668, %v665
        %v744 = vpack.c.b16 %v669, %v666
        %v745 = vpack.c.b16 %v673, %v670
        %v746 = vpack.c.b16 %v674, %v671
        %v747 = vpack.c.b16 %v675, %v672
        %820 = vmatprep.subr.bf16.mxu0 %v698
        %821 = vmatpush1.bf16.msra.mxu0 %v697
        %822 = vmatprep.subr.bf16.mxu0 %v695
        %823 = vmatpush1.bf16.msra.mxu0 %v694
        %824 = vmatprep.subr.bf16.mxu0 %v692
        %825 = vmatpush1.bf16.msra.mxu0 %v691
        %826 = vmatprep.subr.bf16.mxu0 %v689
        %827 = vmatpush1.bf16.msra.mxu0 %v688
        %828 = vmatprep.subr.bf16.mxu0 %v686
        %829 = vmatpush1.bf16.msra.mxu0 %v685
        %830 = vmatprep.subr.bf16.mxu0 %v683
        %831 = vmatpush1.bf16.msra.mxu0 %v682
        %832 = vmatprep.subr.bf16.mxu0 %v680
        %833 = vmatpush1.bf16.msra.mxu0 %v679
        %834 = vmatprep.subr.bf16.mxu0 %v677
        %835 = vmatpush1.bf16.msra.mxu0 %v676
        %836 = vmatprep.subr.bf16.mxu0 %v722
        %837 = vmatpush2.bf16.msra.mxu0 %v721
        %838 = vmatprep.subr.bf16.mxu0 %v719
        %839 = vmatpush2.bf16.msra.mxu0 %v718
        %840 = vmatprep.subr.bf16.mxu0 %v716
        %841 = vmatpush2.bf16.msra.mxu0 %v715
        %842 = vmatprep.subr.bf16.mxu0 %v713
        %843 = vmatpush2.bf16.msra.mxu0 %v712
        %844 = vmatprep.subr.bf16.mxu0 %v710
        %845 = vmatpush2.bf16.msra.mxu0 %v709
        %846 = vmatprep.subr.bf16.mxu0 %v707
        %847 = vmatpush2.bf16.msra.mxu0 %v706
        %848 = vmatprep.subr.bf16.mxu0 %v704
        %849 = vmatpush2.bf16.msra.mxu0 %v703
        %850 = vmatprep.subr.bf16.mxu0 %v701
        %851 = vmatpush2.bf16.msra.mxu0 %v700
        %852 = vmatprep.mubr.bf16.mxu0 %v389
        %853 = vmatmul.mubr.bf16.gmra.mxu0 %v388
        %v854 = vpop.f32.mrf.mxu0
        %v855 = vadd.f32 0.0, %v854
        %v856 = vpop.f32.mrf.mxu0
        %v857 = vadd.f32 0.0, %v856
        %v858 = vpop.f32.mrf.mxu0
        %v859 = vadd.f32 0.0, %v858
        %v860 = vpop.f32.mrf.mxu0
        %v861 = vadd.f32 0.0, %v860
        %862 = vmatprep.mubr.bf16.mxu0 %v392
        %863 = vmatmul.mubr.bf16.gmra.mxu0 %v391
        %v864 = vpop.f32.mrf.mxu0
        %v865 = vadd.f32 0.0, %v864
        %v866 = vpop.f32.mrf.mxu0
        %v867 = vadd.f32 0.0, %v866
        %v868 = vpop.f32.mrf.mxu0
        %v869 = vadd.f32 0.0, %v868
        %v870 = vpop.f32.mrf.mxu0
        %v871 = vadd.f32 0.0, %v870
        %872 = vmatprep.mubr.bf16.mxu0 %v395
        %873 = vmatmul.mubr.bf16.gmra.mxu0 %v394
        %v874 = vpop.f32.mrf.mxu0
        %v875 = vadd.f32 0.0, %v874
        %v876 = vpop.f32.mrf.mxu0
        %v877 = vadd.f32 0.0, %v876
        %v878 = vpop.f32.mrf.mxu0
        %v879 = vadd.f32 0.0, %v878
        %v880 = vpop.f32.mrf.mxu0
        %v881 = vadd.f32 0.0, %v880
        %882 = vmatprep.mubr.bf16.mxu0 %v398
        %883 = vmatmul.mubr.bf16.gmra.mxu0 %v397
        %v884 = vpop.f32.mrf.mxu0
        %v885 = vadd.f32 0.0, %v884
        %v886 = vpop.f32.mrf.mxu0
        %v887 = vadd.f32 0.0, %v886
        %v888 = vpop.f32.mrf.mxu0
        %v889 = vadd.f32 0.0, %v888
        %v890 = vpop.f32.mrf.mxu0
        %v891 = vadd.f32 0.0, %v890
        %892 = vmatprep.mubr.bf16.mxu0 %v401
        %893 = vmatmul.mubr.bf16.gmra.mxu0 %v400
        %v894 = vpop.f32.mrf.mxu0
        %v895 = vadd.f32 0.0, %v894
        %v896 = vpop.f32.mrf.mxu0
        %v897 = vadd.f32 0.0, %v896
        %v898 = vpop.f32.mrf.mxu0
        %v899 = vadd.f32 0.0, %v898
        %v900 = vpop.f32.mrf.mxu0
        %v901 = vadd.f32 0.0, %v900
        %902 = vmatprep.mubr.bf16.mxu0 %v404
        %903 = vmatmul.mubr.bf16.gmra.mxu0 %v403
        %v904 = vpop.f32.mrf.mxu0
        %v905 = vadd.f32 0.0, %v904
        %v906 = vpop.f32.mrf.mxu0
        %v907 = vadd.f32 0.0, %v906
        %v908 = vpop.f32.mrf.mxu0
        %v909 = vadd.f32 0.0, %v908
        %v910 = vpop.f32.mrf.mxu0
        %v911 = vadd.f32 0.0, %v910
        %912 = vmatprep.mubr.bf16.mxu0 %v407
        %913 = vmatmul.mubr.bf16.gmra.mxu0 %v406
        %v914 = vpop.f32.mrf.mxu0
        %v915 = vadd.f32 0.0, %v914
        %v916 = vpop.f32.mrf.mxu0
        %v917 = vadd.f32 0.0, %v916
        %v918 = vpop.f32.mrf.mxu0
        %v919 = vadd.f32 0.0, %v918
        %v920 = vpop.f32.mrf.mxu0
        %v921 = vadd.f32 0.0, %v920
        %922 = vmatprep.mubr.bf16.mxu0 %v410
        %923 = vmatmul.mubr.bf16.gmra.mxu0 %v409
        %v924 = vpop.f32.mrf.mxu0
        %v925 = vadd.f32 0.0, %v924
        %v926 = vpop.f32.mrf.mxu0
        %v927 = vadd.f32 0.0, %v926
        %v928 = vpop.f32.mrf.mxu0
        %v929 = vadd.f32 0.0, %v928
        %v930 = vpop.f32.mrf.mxu0
        %v931 = vadd.f32 0.0, %v930
        %932 = vdwg.mxu0
        %933 = vmatprep.subr.bf16.mxu0 %v746
        %934 = vmatpush1.bf16.msra.mxu0 %v745
        %935 = vmatprep.subr.bf16.mxu0 %v743
        %936 = vmatpush1.bf16.msra.mxu0 %v742
        %937 = vmatprep.subr.bf16.mxu0 %v740
        %938 = vmatpush1.bf16.msra.mxu0 %v739
        %939 = vmatprep.subr.bf16.mxu0 %v737
        %940 = vmatpush1.bf16.msra.mxu0 %v736
        %941 = vmatprep.subr.bf16.mxu0 %v734
        %942 = vmatpush1.bf16.msra.mxu0 %v733
        %943 = vmatprep.subr.bf16.mxu0 %v731
        %944 = vmatpush1.bf16.msra.mxu0 %v730
        %945 = vmatprep.subr.bf16.mxu0 %v728
        %946 = vmatpush1.bf16.msra.mxu0 %v727
        %947 = vmatprep.subr.bf16.mxu0 %v725
        %948 = vmatpush1.bf16.msra.mxu0 %v724
        %949 = vmatprep.subr.bf16.mxu0 0
        %950 = vmatpush2.bf16.msra.mxu0 0
        %951 = vmatprep.subr.bf16.mxu0 0
        %952 = vmatpush2.bf16.msra.mxu0 0
        %953 = vmatprep.subr.bf16.mxu0 0
        %954 = vmatpush2.bf16.msra.mxu0 0
        %955 = vmatprep.subr.bf16.mxu0 0
        %956 = vmatpush2.bf16.msra.mxu0 0
        %957 = vmatprep.subr.bf16.mxu0 0
        %958 = vmatpush2.bf16.msra.mxu0 0
        %959 = vmatprep.subr.bf16.mxu0 0
        %960 = vmatpush2.bf16.msra.mxu0 0
        %961 = vmatprep.subr.bf16.mxu0 0
        %962 = vmatpush2.bf16.msra.mxu0 0
        %963 = vmatprep.subr.bf16.mxu0 0
        %964 = vmatpush2.bf16.msra.mxu0 0
        %965 = vmatprep.mubr.bf16.mxu0 0
        %966 = vmatmul.mubr.bf16.gmra.mxu0 %v390
        %v967 = vpop.f32.mrf.mxu0
        %v968 = vadd.f32 %v855, %v967
        %v969 = vpop.f32.mrf.mxu0
        %v970 = vadd.f32 %v857, %v969
        %v971 = vpop.f32.mrf.mxu0
        %v972 = vadd.f32 %v859, %v971
        %v973 = vpop.f32.mrf.mxu0
        %v974 = vadd.f32 %v861, %v973
        %975 = vmatprep.mubr.bf16.mxu0 0
        %976 = vmatmul.mubr.bf16.gmra.mxu0 %v393
        %v977 = vpop.f32.mrf.mxu0
        %v978 = vadd.f32 %v865, %v977
        %v979 = vpop.f32.mrf.mxu0
        %v980 = vadd.f32 %v867, %v979
        %v981 = vpop.f32.mrf.mxu0
        %v982 = vadd.f32 %v869, %v981
        %v983 = vpop.f32.mrf.mxu0
        %v984 = vadd.f32 %v871, %v983
        %985 = vmatprep.mubr.bf16.mxu0 0
        %986 = vmatmul.mubr.bf16.gmra.mxu0 %v396
        %v987 = vpop.f32.mrf.mxu0
        %v988 = vadd.f32 %v875, %v987
        %v989 = vpop.f32.mrf.mxu0
        %v990 = vadd.f32 %v877, %v989
        %v991 = vpop.f32.mrf.mxu0
        %v992 = vadd.f32 %v879, %v991
        %v993 = vpop.f32.mrf.mxu0
        %v994 = vadd.f32 %v881, %v993
        %995 = vmatprep.mubr.bf16.mxu0 0
        %996 = vmatmul.mubr.bf16.gmra.mxu0 %v399
        %v997 = vpop.f32.mrf.mxu0
        %v998 = vadd.f32 %v885, %v997
        %v999 = vpop.f32.mrf.mxu0
        %v1000 = vadd.f32 %v887, %v999
        %v1001 = vpop.f32.mrf.mxu0
        %v1002 = vadd.f32 %v889, %v1001
        %v1003 = vpop.f32.mrf.mxu0
        %v1004 = vadd.f32 %v891, %v1003
        %1005 = vmatprep.mubr.bf16.mxu0 0
        %1006 = vmatmul.mubr.bf16.gmra.mxu0 %v402
        %v1007 = vpop.f32.mrf.mxu0
        %v1008 = vadd.f32 %v895, %v1007
        %v1009 = vpop.f32.mrf.mxu0
        %v1010 = vadd.f32 %v897, %v1009
        %v1011 = vpop.f32.mrf.mxu0
        %v1012 = vadd.f32 %v899, %v1011
        %v1013 = vpop.f32.mrf.mxu0
        %v1014 = vadd.f32 %v901, %v1013
        %1015 = vmatprep.mubr.bf16.mxu0 0
        %1016 = vmatmul.mubr.bf16.gmra.mxu0 %v405
        %v1017 = vpop.f32.mrf.mxu0
        %v1018 = vadd.f32 %v905, %v1017
        %v1019 = vpop.f32.mrf.mxu0
        %v1020 = vadd.f32 %v907, %v1019
        %v1021 = vpop.f32.mrf.mxu0
        %v1022 = vadd.f32 %v909, %v1021
        %v1023 = vpop.f32.mrf.mxu0
        %v1024 = vadd.f32 %v911, %v1023
        %1025 = vmatprep.mubr.bf16.mxu0 0
        %1026 = vmatmul.mubr.bf16.gmra.mxu0 %v408
        %v1027 = vpop.f32.mrf.mxu0
        %v1028 = vadd.f32 %v915, %v1027
        %v1029 = vpop.f32.mrf.mxu0
        %v1030 = vadd.f32 %v917, %v1029
        %v1031 = vpop.f32.mrf.mxu0
        %v1032 = vadd.f32 %v919, %v1031
        %v1033 = vpop.f32.mrf.mxu0
        %v1034 = vadd.f32 %v921, %v1033
        %1035 = vmatprep.mubr.bf16.mxu0 0
        %1036 = vmatmul.mubr.bf16.gmra.mxu0 %v411
        %v1037 = vpop.f32.mrf.mxu0
        %v1038 = vadd.f32 %v925, %v1037
        %v1039 = vpop.f32.mrf.mxu0
        %v1040 = vadd.f32 %v927, %v1039
        %v1041 = vpop.f32.mrf.mxu0
        %v1042 = vadd.f32 %v929, %v1041
        %v1043 = vpop.f32.mrf.mxu0
        %v1044 = vadd.f32 %v931, %v1043
        %1045 = vdwg.mxu0
        %1046 = vmatprep.subr.bf16.mxu0 0
        %1047 = vmatpush1.bf16.msra.mxu0 %v699
        %1048 = vmatprep.subr.bf16.mxu0 0
        %1049 = vmatpush1.bf16.msra.mxu0 %v696
        %1050 = vmatprep.subr.bf16.mxu0 0
        %1051 = vmatpush1.bf16.msra.mxu0 %v693
        %1052 = vmatprep.subr.bf16.mxu0 0
        %1053 = vmatpush1.bf16.msra.mxu0 %v690
        %1054 = vmatprep.subr.bf16.mxu0 0
        %1055 = vmatpush1.bf16.msra.mxu0 %v687
        %1056 = vmatprep.subr.bf16.mxu0 0
        %1057 = vmatpush1.bf16.msra.mxu0 %v684
        %1058 = vmatprep.subr.bf16.mxu0 0
        %1059 = vmatpush1.bf16.msra.mxu0 %v681
        %1060 = vmatprep.subr.bf16.mxu0 0
        %1061 = vmatpush1.bf16.msra.mxu0 %v678
        %1062 = vmatprep.subr.bf16.mxu0 0
        %1063 = vmatpush2.bf16.msra.mxu0 %v723
        %1064 = vmatprep.subr.bf16.mxu0 0
        %1065 = vmatpush2.bf16.msra.mxu0 %v720
        %1066 = vmatprep.subr.bf16.mxu0 0
        %1067 = vmatpush2.bf16.msra.mxu0 %v717
        %1068 = vmatprep.subr.bf16.mxu0 0
        %1069 = vmatpush2.bf16.msra.mxu0 %v714
        %1070 = vmatprep.subr.bf16.mxu0 0
        %1071 = vmatpush2.bf16.msra.mxu0 %v711
        %1072 = vmatprep.subr.bf16.mxu0 0
        %1073 = vmatpush2.bf16.msra.mxu0 %v708
        %1074 = vmatprep.subr.bf16.mxu0 0
        %1075 = vmatpush2.bf16.msra.mxu0 %v705
        %1076 = vmatprep.subr.bf16.mxu0 0
        %1077 = vmatpush2.bf16.msra.mxu0 %v702
        %1078 = vmatprep.mubr.bf16.mxu0 %v389
        %1079 = vmatmul.mubr.bf16.gmra.mxu0 %v388
        %v1080 = vpop.f32.mrf.mxu0
        %v1081 = vadd.f32 0.0, %v1080
        %v1082 = vpop.f32.mrf.mxu0
        %v1083 = vpop.f32.mrf.mxu0
        %v1084 = vadd.f32 0.0, %v1083
        %v1085 = vpop.f32.mrf.mxu0
        %1086 = vmatprep.mubr.bf16.mxu0 %v392
        %1087 = vmatmul.mubr.bf16.gmra.mxu0 %v391
        %v1088 = vpop.f32.mrf.mxu0
        %v1089 = vadd.f32 0.0, %v1088
        %v1090 = vpop.f32.mrf.mxu0
        %v1091 = vpop.f32.mrf.mxu0
        %v1092 = vadd.f32 0.0, %v1091
        %v1093 = vpop.f32.mrf.mxu0
        %1094 = vmatprep.mubr.bf16.mxu0 %v395
        %1095 = vmatmul.mubr.bf16.gmra.mxu0 %v394
        %v1096 = vpop.f32.mrf.mxu0
        %v1097 = vadd.f32 0.0, %v1096
        %v1098 = vpop.f32.mrf.mxu0
        %v1099 = vpop.f32.mrf.mxu0
        %v1100 = vadd.f32 0.0, %v1099
        %v1101 = vpop.f32.mrf.mxu0
        %1102 = vmatprep.mubr.bf16.mxu0 %v398
        %1103 = vmatmul.mubr.bf16.gmra.mxu0 %v397
        %v1104 = vpop.f32.mrf.mxu0
        %v1105 = vadd.f32 0.0, %v1104
        %v1106 = vpop.f32.mrf.mxu0
        %v1107 = vpop.f32.mrf.mxu0
        %v1108 = vadd.f32 0.0, %v1107
        %v1109 = vpop.f32.mrf.mxu0
        %1110 = vmatprep.mubr.bf16.mxu0 %v401
        %1111 = vmatmul.mubr.bf16.gmra.mxu0 %v400
        %v1112 = vpop.f32.mrf.mxu0
        %v1113 = vadd.f32 0.0, %v1112
        %v1114 = vpop.f32.mrf.mxu0
        %v1115 = vpop.f32.mrf.mxu0
        %v1116 = vadd.f32 0.0, %v1115
        %v1117 = vpop.f32.mrf.mxu0
        %1118 = vmatprep.mubr.bf16.mxu0 %v404
        %1119 = vmatmul.mubr.bf16.gmra.mxu0 %v403
        %v1120 = vpop.f32.mrf.mxu0
        %v1121 = vadd.f32 0.0, %v1120
        %v1122 = vpop.f32.mrf.mxu0
        %v1123 = vpop.f32.mrf.mxu0
        %v1124 = vadd.f32 0.0, %v1123
        %v1125 = vpop.f32.mrf.mxu0
        %1126 = vmatprep.mubr.bf16.mxu0 %v407
        %1127 = vmatmul.mubr.bf16.gmra.mxu0 %v406
        %v1128 = vpop.f32.mrf.mxu0
        %v1129 = vadd.f32 0.0, %v1128
        %v1130 = vpop.f32.mrf.mxu0
        %v1131 = vpop.f32.mrf.mxu0
        %v1132 = vadd.f32 0.0, %v1131
        %v1133 = vpop.f32.mrf.mxu0
        %1134 = vmatprep.mubr.bf16.mxu0 %v410
        %1135 = vmatmul.mubr.bf16.gmra.mxu0 %v409
        %v1136 = vpop.f32.mrf.mxu0
        %v1137 = vadd.f32 0.0, %v1136
        %v1138 = vpop.f32.mrf.mxu0
        %v1139 = vpop.f32.mrf.mxu0
        %v1140 = vadd.f32 0.0, %v1139
        %v1141 = vpop.f32.mrf.mxu0
        %1142 = vdwg.mxu0
        %1143 = vmatprep.subr.bf16.mxu0 0
        %1144 = vmatpush1.bf16.msra.mxu0 %v747
        %1145 = vmatprep.subr.bf16.mxu0 0
        %1146 = vmatpush1.bf16.msra.mxu0 %v744
        %1147 = vmatprep.subr.bf16.mxu0 0
        %1148 = vmatpush1.bf16.msra.mxu0 %v741
        %1149 = vmatprep.subr.bf16.mxu0 0
        %1150 = vmatpush1.bf16.msra.mxu0 %v738
        %1151 = vmatprep.subr.bf16.mxu0 0
        %1152 = vmatpush1.bf16.msra.mxu0 %v735
        %1153 = vmatprep.subr.bf16.mxu0 0
        %1154 = vmatpush1.bf16.msra.mxu0 %v732
        %1155 = vmatprep.subr.bf16.mxu0 0
        %1156 = vmatpush1.bf16.msra.mxu0 %v729
        %1157 = vmatprep.subr.bf16.mxu0 0
        %1158 = vmatpush1.bf16.msra.mxu0 %v726
        %1159 = vmatprep.subr.bf16.mxu0 0
        %1160 = vmatpush2.bf16.msra.mxu0 0
        %1161 = vmatprep.subr.bf16.mxu0 0
        %1162 = vmatpush2.bf16.msra.mxu0 0
        %1163 = vmatprep.subr.bf16.mxu0 0
        %1164 = vmatpush2.bf16.msra.mxu0 0
        %1165 = vmatprep.subr.bf16.mxu0 0
        %1166 = vmatpush2.bf16.msra.mxu0 0
        %1167 = vmatprep.subr.bf16.mxu0 0
        %1168 = vmatpush2.bf16.msra.mxu0 0
        %1169 = vmatprep.subr.bf16.mxu0 0
        %1170 = vmatpush2.bf16.msra.mxu0 0
        %1171 = vmatprep.subr.bf16.mxu0 0
        %1172 = vmatpush2.bf16.msra.mxu0 0
        %1173 = vmatprep.subr.bf16.mxu0 0
        %1174 = vmatpush2.bf16.msra.mxu0 0
        %1175 = vmatprep.mubr.bf16.mxu0 0
        %1176 = vmatmul.mubr.bf16.gmra.mxu0 %v390
        %v1177 = vpop.f32.mrf.mxu0
        %v1178 = vadd.f32 %v1081, %v1177
        %v1179 = vpop.f32.mrf.mxu0
        %v1180 = vpop.f32.mrf.mxu0
        %v1181 = vadd.f32 %v1084, %v1180
        %v1182 = vpop.f32.mrf.mxu0
        %1183 = vmatprep.mubr.bf16.mxu0 0
        %1184 = vmatmul.mubr.bf16.gmra.mxu0 %v393
        %v1185 = vpop.f32.mrf.mxu0
        %v1186 = vadd.f32 %v1089, %v1185
        %v1187 = vpop.f32.mrf.mxu0
        %v1188 = vpop.f32.mrf.mxu0
        %v1189 = vadd.f32 %v1092, %v1188
        %v1190 = vpop.f32.mrf.mxu0
        %1191 = vmatprep.mubr.bf16.mxu0 0
        %1192 = vmatmul.mubr.bf16.gmra.mxu0 %v396
        %v1193 = vpop.f32.mrf.mxu0
        %v1194 = vadd.f32 %v1097, %v1193
        %v1195 = vpop.f32.mrf.mxu0
        %v1196 = vpop.f32.mrf.mxu0
        %v1197 = vadd.f32 %v1100, %v1196
        %v1198 = vpop.f32.mrf.mxu0
        %1199 = vmatprep.mubr.bf16.mxu0 0
        %1200 = vmatmul.mubr.bf16.gmra.mxu0 %v399
        %v1201 = vpop.f32.mrf.mxu0
        %v1202 = vadd.f32 %v1105, %v1201
        %v1203 = vpop.f32.mrf.mxu0
        %v1204 = vpop.f32.mrf.mxu0
        %v1205 = vadd.f32 %v1108, %v1204
        %v1206 = vpop.f32.mrf.mxu0
        %1207 = vmatprep.mubr.bf16.mxu0 0
        %1208 = vmatmul.mubr.bf16.gmra.mxu0 %v402
        %v1209 = vpop.f32.mrf.mxu0
        %v1210 = vadd.f32 %v1113, %v1209
        %v1211 = vpop.f32.mrf.mxu0
        %v1212 = vpop.f32.mrf.mxu0
        %v1213 = vadd.f32 %v1116, %v1212
        %v1214 = vpop.f32.mrf.mxu0
        %1215 = vmatprep.mubr.bf16.mxu0 0
        %1216 = vmatmul.mubr.bf16.gmra.mxu0 %v405
        %v1217 = vpop.f32.mrf.mxu0
        %v1218 = vadd.f32 %v1121, %v1217
        %v1219 = vpop.f32.mrf.mxu0
        %v1220 = vpop.f32.mrf.mxu0
        %v1221 = vadd.f32 %v1124, %v1220
        %v1222 = vpop.f32.mrf.mxu0
        %1223 = vmatprep.mubr.bf16.mxu0 0
        %1224 = vmatmul.mubr.bf16.gmra.mxu0 %v408
        %v1225 = vpop.f32.mrf.mxu0
        %v1226 = vadd.f32 %v1129, %v1225
        %v1227 = vpop.f32.mrf.mxu0
        %v1228 = vpop.f32.mrf.mxu0
        %v1229 = vadd.f32 %v1132, %v1228
        %v1230 = vpop.f32.mrf.mxu0
        %1231 = vmatprep.mubr.bf16.mxu0 0
        %1232 = vmatmul.mubr.bf16.gmra.mxu0 %v411
        %v1233 = vpop.f32.mrf.mxu0
        %v1234 = vadd.f32 %v1137, %v1233
        %v1235 = vpop.f32.mrf.mxu0
        %v1236 = vpop.f32.mrf.mxu0
        %v1237 = vadd.f32 %v1140, %v1236
        %v1238 = vpop.f32.mrf.mxu0
        %1239 = vdwg.mxu0
        %v1240 = vpack.c.bf16 %v972, %v968
        %v1241 = vpack.c.bf16 %v982, %v978
        %v1242 = vpack.c.bf16 %v992, %v988
        %v1243 = vpack.c.bf16 %v1002, %v998
        %v1244 = vpack.c.bf16 %v1012, %v1008
        %v1245 = vpack.c.bf16 %v1022, %v1018
        %v1246 = vpack.c.bf16 %v1032, %v1028
        %v1247 = vpack.c.bf16 %v1042, %v1038
        %v1248 = vpack.c.bf16 %v974, %v970
        %v1249 = vpack.c.bf16 %v984, %v980
        %v1250 = vpack.c.bf16 %v994, %v990
        %v1251 = vpack.c.bf16 %v1004, %v1000
        %v1252 = vpack.c.bf16 %v1014, %v1010
        %v1253 = vpack.c.bf16 %v1024, %v1020
        %v1254 = vpack.c.bf16 %v1034, %v1030
        %v1255 = vpack.c.bf16 %v1044, %v1040
        %v1256 = vpack.c.bf16 %v1181, %v1178
        %v1257 = vpack.c.bf16 %v1189, %v1186
        %v1258 = vpack.c.bf16 %v1197, %v1194
        %v1259 = vpack.c.bf16 %v1205, %v1202
        %v1260 = vpack.c.bf16 %v1213, %v1210
        %v1261 = vpack.c.bf16 %v1221, %v1218
        %v1262 = vpack.c.bf16 %v1229, %v1226
        %v1263 = vpack.c.bf16 %v1237, %v1234
        %1264 = vmatprep.subr.bf16.mxu0 0
        %1265 = vmatpush1.bf16.xpose.msra.mxu0 %v1247
        %1266 = vmatprep.subr.bf16.mxu0 0
        %1267 = vmatpush1.bf16.xpose.msra.mxu0 %v1246
        %1268 = vmatprep.subr.bf16.mxu0 0
        %1269 = vmatpush1.bf16.xpose.msra.mxu0 %v1245
        %1270 = vmatprep.subr.bf16.mxu0 0
        %1271 = vmatpush1.bf16.xpose.msra.mxu0 %v1244
        %1272 = vmatprep.subr.bf16.mxu0 0
        %1273 = vmatpush1.bf16.xpose.msra.mxu0 %v1243
        %1274 = vmatprep.subr.bf16.mxu0 0
        %1275 = vmatpush1.bf16.xpose.msra.mxu0 %v1242
        %1276 = vmatprep.subr.bf16.mxu0 0
        %1277 = vmatpush1.bf16.xpose.msra.mxu0 %v1241
        %1278 = vmatprep.subr.bf16.mxu0 0
        %1279 = vmatpush1.bf16.xpose.msra.mxu0 %v1240
        %1280 = vmatprep.subr.bf16.mxu0 0
        %1281 = vmatpush2.bf16.xpose.msra.mxu0 0
        %1282 = vmatprep.subr.bf16.mxu0 0
        %1283 = vmatpush2.bf16.xpose.msra.mxu0 0
        %1284 = vmatprep.subr.bf16.mxu0 0
        %1285 = vmatpush2.bf16.xpose.msra.mxu0 0
        %1286 = vmatprep.subr.bf16.mxu0 0
        %1287 = vmatpush2.bf16.xpose.msra.mxu0 0
        %1288 = vmatprep.subr.bf16.mxu0 0
        %1289 = vmatpush2.bf16.xpose.msra.mxu0 0
        %1290 = vmatprep.subr.bf16.mxu0 0
        %1291 = vmatpush2.bf16.xpose.msra.mxu0 0
        %1292 = vmatprep.subr.bf16.mxu0 0
        %1293 = vmatpush2.bf16.xpose.msra.mxu0 0
        %1294 = vmatprep.subr.bf16.mxu0 0
        %1295 = vmatpush2.bf16.xpose.msra.mxu0 0
        %1296 = vmatprep.mubr.bf16.mxu0 0
        %1297 = vmatmul.mubr.bf16.gmra.mxu0 %v1248
        %v1298 = vpop.f32.mrf.mxu0
        %v1299 = vadd.f32 0.0, %v1298
        %v1300 = vpop.f32.mrf.mxu0
        %v1301 = vpop.f32.mrf.mxu0
        %v1302 = vadd.f32 0.0, %v1301
        %v1303 = vpop.f32.mrf.mxu0
        %1304 = vmatprep.mubr.bf16.mxu0 0
        %1305 = vmatmul.mubr.bf16.gmra.mxu0 %v1249
        %v1306 = vpop.f32.mrf.mxu0
        %v1307 = vadd.f32 0.0, %v1306
        %v1308 = vpop.f32.mrf.mxu0
        %v1309 = vpop.f32.mrf.mxu0
        %v1310 = vadd.f32 0.0, %v1309
        %v1311 = vpop.f32.mrf.mxu0
        %1312 = vmatprep.mubr.bf16.mxu0 0
        %1313 = vmatmul.mubr.bf16.gmra.mxu0 %v1250
        %v1314 = vpop.f32.mrf.mxu0
        %v1315 = vadd.f32 0.0, %v1314
        %v1316 = vpop.f32.mrf.mxu0
        %v1317 = vpop.f32.mrf.mxu0
        %v1318 = vadd.f32 0.0, %v1317
        %v1319 = vpop.f32.mrf.mxu0
        %1320 = vmatprep.mubr.bf16.mxu0 0
        %1321 = vmatmul.mubr.bf16.gmra.mxu0 %v1251
        %v1322 = vpop.f32.mrf.mxu0
        %v1323 = vadd.f32 0.0, %v1322
        %v1324 = vpop.f32.mrf.mxu0
        %v1325 = vpop.f32.mrf.mxu0
        %v1326 = vadd.f32 0.0, %v1325
        %v1327 = vpop.f32.mrf.mxu0
        %1328 = vmatprep.mubr.bf16.mxu0 0
        %1329 = vmatmul.mubr.bf16.gmra.mxu0 %v1252
        %v1330 = vpop.f32.mrf.mxu0
        %v1331 = vadd.f32 0.0, %v1330
        %v1332 = vpop.f32.mrf.mxu0
        %v1333 = vpop.f32.mrf.mxu0
        %v1334 = vadd.f32 0.0, %v1333
        %v1335 = vpop.f32.mrf.mxu0
        %1336 = vmatprep.mubr.bf16.mxu0 0
        %1337 = vmatmul.mubr.bf16.gmra.mxu0 %v1253
        %v1338 = vpop.f32.mrf.mxu0
        %v1339 = vadd.f32 0.0, %v1338
        %v1340 = vpop.f32.mrf.mxu0
        %v1341 = vpop.f32.mrf.mxu0
        %v1342 = vadd.f32 0.0, %v1341
        %v1343 = vpop.f32.mrf.mxu0
        %1344 = vmatprep.mubr.bf16.mxu0 0
        %1345 = vmatmul.mubr.bf16.gmra.mxu0 %v1254
        %v1346 = vpop.f32.mrf.mxu0
        %v1347 = vadd.f32 0.0, %v1346
        %v1348 = vpop.f32.mrf.mxu0
        %v1349 = vpop.f32.mrf.mxu0
        %v1350 = vadd.f32 0.0, %v1349
        %v1351 = vpop.f32.mrf.mxu0
        %1352 = vmatprep.mubr.bf16.mxu0 0
        %1353 = vmatmul.mubr.bf16.gmra.mxu0 %v1255
        %v1354 = vpop.f32.mrf.mxu0
        %v1355 = vadd.f32 0.0, %v1354
        %v1356 = vpop.f32.mrf.mxu0
        %v1357 = vpop.f32.mrf.mxu0
        %v1358 = vadd.f32 0.0, %v1357
        %v1359 = vpop.f32.mrf.mxu0
        %1360 = vdwg.mxu0
        %v1361 = vlaneseq
        %v1362 = vshrl.u32 %v1361, 7
        %v1363 = vadd.s32 %v1362, 8
        %v1364 = vadd.s32 %v1362, 16
        %v1365 = vadd.s32 %v1362, 24
        %v1366 = vadd.s32 %v1362, 32
        %v1367 = vadd.s32 %v1362, 40
        %v1368 = vadd.s32 %v1362, 48
        %v1369 = vadd.s32 %v1362, 56
        %v1370 = vadd.s32 %v1362, 64
        %v1371 = vadd.s32 %v1362, 72
        %v1372 = vadd.s32 %v1362, 80
        %v1373 = vadd.s32 %v1362, 88
        %v1374 = vadd.s32 %v1362, 96
        %v1375 = vadd.s32 %v1362, 104
        %v1376 = vadd.s32 %v1362, 112
        %v1377 = vadd.s32 %v1362, 120
        %v1378 = vlaneseq
        %v1379 = vand.u32 %v1378, 127
        %vm1380 = vcmp.ge.s32.totalorder %v1362, %v1379
        %vm1381 = vcmp.ge.s32.totalorder %v1363, %v1379
        %vm1382 = vcmp.ge.s32.totalorder %v1364, %v1379
        %vm1383 = vcmp.ge.s32.totalorder %v1365, %v1379
        %vm1384 = vcmp.ge.s32.totalorder %v1366, %v1379
        %vm1385 = vcmp.ge.s32.totalorder %v1367, %v1379
        %vm1386 = vcmp.ge.s32.totalorder %v1368, %v1379
        %vm1387 = vcmp.ge.s32.totalorder %v1369, %v1379
        %vm1388 = vcmp.ge.s32.totalorder %v1370, %v1379
        %vm1389 = vcmp.ge.s32.totalorder %v1371, %v1379
        %vm1390 = vcmp.ge.s32.totalorder %v1372, %v1379
        %vm1391 = vcmp.ge.s32.totalorder %v1373, %v1379
        %vm1392 = vcmp.ge.s32.totalorder %v1374, %v1379
        %vm1393 = vcmp.ge.s32.totalorder %v1375, %v1379
        %vm1394 = vcmp.ge.s32.totalorder %v1376, %v1379
        %vm1395 = vcmp.ge.s32.totalorder %v1377, %v1379
        %v1396 = vsel %vm1380, %v1299, -inf
        %v1397 = vsel %vm1381, %v1302, -inf
        %v1398 = vsel %vm1382, %v1307, -inf
        %v1399 = vsel %vm1383, %v1310, -inf
        %v1400 = vsel %vm1384, %v1315, -inf
        %v1401 = vsel %vm1385, %v1318, -inf
        %v1402 = vsel %vm1386, %v1323, -inf
        %v1403 = vsel %vm1387, %v1326, -inf
        %v1404 = vsel %vm1388, %v1331, -inf
        %v1405 = vsel %vm1389, %v1334, -inf
        %v1406 = vsel %vm1390, %v1339, -inf
        %v1407 = vsel %vm1391, %v1342, -inf
        %v1408 = vsel %vm1392, %v1347, -inf
        %v1409 = vsel %vm1393, %v1350, -inf
        %v1410 = vsel %vm1394, %v1355, -inf
        %v1411 = vsel %vm1395, %v1358, -inf
        %1412 = vmax.xlane.f32.xlu0 %v1396
        %v1413 = vpop.xlane.xlu0 %1412
        %1414 = vmax.xlane.f32.xlu0 %v1397
        %v1415 = vpop.xlane.xlu0 %1414
        %1416 = vmax.xlane.f32.xlu0 %v1398
        %v1417 = vpop.xlane.xlu0 %1416
        %1418 = vmax.xlane.f32.xlu0 %v1399
        %v1419 = vpop.xlane.xlu0 %1418
        %1420 = vmax.xlane.f32.xlu0 %v1400
        %v1421 = vpop.xlane.xlu0 %1420
        %1422 = vmax.xlane.f32.xlu0 %v1401
        %v1423 = vpop.xlane.xlu0 %1422
        %1424 = vmax.xlane.f32.xlu0 %v1402
        %v1425 = vpop.xlane.xlu0 %1424
        %1426 = vmax.xlane.f32.xlu0 %v1403
        %v1427 = vpop.xlane.xlu0 %1426
        %1428 = vmax.xlane.f32.xlu0 %v1404
        %v1429 = vpop.xlane.xlu0 %1428
        %1430 = vmax.xlane.f32.xlu0 %v1405
        %v1431 = vpop.xlane.xlu0 %1430
        %1432 = vmax.xlane.f32.xlu0 %v1406
        %v1433 = vpop.xlane.xlu0 %1432
        %1434 = vmax.xlane.f32.xlu0 %v1407
        %v1435 = vpop.xlane.xlu0 %1434
        %1436 = vmax.xlane.f32.xlu0 %v1408
        %v1437 = vpop.xlane.xlu0 %1436
        %1438 = vmax.xlane.f32.xlu0 %v1409
        %v1439 = vpop.xlane.xlu0 %1438
        %1440 = vmax.xlane.f32.xlu0 %v1410
        %v1441 = vpop.xlane.xlu0 %1440
        %1442 = vmax.xlane.f32.xlu0 %v1411
        %v1443 = vpop.xlane.xlu0 %1442
        %v1444 = vsub.f32 %v1396, %v1413
        %v1445 = vsub.f32 %v1397, %v1415
        %v1446 = vsub.f32 %v1398, %v1417
        %v1447 = vsub.f32 %v1399, %v1419
        %v1448 = vsub.f32 %v1400, %v1421
        %v1449 = vsub.f32 %v1401, %v1423
        %v1450 = vsub.f32 %v1402, %v1425
        %v1451 = vsub.f32 %v1403, %v1427
        %v1452 = vsub.f32 %v1404, %v1429
        %v1453 = vsub.f32 %v1405, %v1431
        %v1454 = vsub.f32 %v1406, %v1433
        %v1455 = vsub.f32 %v1407, %v1435
        %v1456 = vsub.f32 %v1408, %v1437
        %v1457 = vsub.f32 %v1409, %v1439
        %v1458 = vsub.f32 %v1410, %v1441
        %v1459 = vsub.f32 %v1411, %v1443
        %v1460 = vmul.f32 %v1444, 1.442695
        %v1461 = vpow.pop %v1460
        %v1462 = vmul.f32 %v1445, 1.442695
        %v1463 = vpow.pop %v1462
        %v1464 = vmul.f32 %v1446, 1.442695
        %v1465 = vpow.pop %v1464
        %v1466 = vmul.f32 %v1447, 1.442695
        %v1467 = vpow.pop %v1466
        %v1468 = vmul.f32 %v1448, 1.442695
        %v1469 = vpow.pop %v1468
        %v1470 = vmul.f32 %v1449, 1.442695
        %v1471 = vpow.pop %v1470
        %v1472 = vmul.f32 %v1450, 1.442695
        %v1473 = vpow.pop %v1472
        %v1474 = vmul.f32 %v1451, 1.442695
        %v1475 = vpow.pop %v1474
        %v1476 = vmul.f32 %v1452, 1.442695
        %v1477 = vpow.pop %v1476
        %v1478 = vmul.f32 %v1453, 1.442695
        %v1479 = vpow.pop %v1478
        %v1480 = vmul.f32 %v1454, 1.442695
        %v1481 = vpow.pop %v1480
        %v1482 = vmul.f32 %v1455, 1.442695
        %v1483 = vpow.pop %v1482
        %v1484 = vmul.f32 %v1456, 1.442695
        %v1485 = vpow.pop %v1484
        %v1486 = vmul.f32 %v1457, 1.442695
        %v1487 = vpow.pop %v1486
        %v1488 = vmul.f32 %v1458, 1.442695
        %v1489 = vpow.pop %v1488
        %v1490 = vmul.f32 %v1459, 1.442695
        %v1491 = vpow.pop %v1490
        %1492 = vadd.xlane.f32.xlu0 %v1461
        %v1493 = vpop.xlane.xlu0 %1492
        %1494 = vadd.xlane.f32.xlu0 %v1463
        %v1495 = vpop.xlane.xlu0 %1494
        %1496 = vadd.xlane.f32.xlu0 %v1465
        %v1497 = vpop.xlane.xlu0 %1496
        %1498 = vadd.xlane.f32.xlu0 %v1467
        %v1499 = vpop.xlane.xlu0 %1498
        %1500 = vadd.xlane.f32.xlu0 %v1469
        %v1501 = vpop.xlane.xlu0 %1500
        %1502 = vadd.xlane.f32.xlu0 %v1471
        %v1503 = vpop.xlane.xlu0 %1502
        %1504 = vadd.xlane.f32.xlu0 %v1473
        %v1505 = vpop.xlane.xlu0 %1504
        %1506 = vadd.xlane.f32.xlu0 %v1475
        %v1507 = vpop.xlane.xlu0 %1506
        %1508 = vadd.xlane.f32.xlu0 %v1477
        %v1509 = vpop.xlane.xlu0 %1508
        %1510 = vadd.xlane.f32.xlu0 %v1479
        %v1511 = vpop.xlane.xlu0 %1510
        %1512 = vadd.xlane.f32.xlu0 %v1481
        %v1513 = vpop.xlane.xlu0 %1512
        %1514 = vadd.xlane.f32.xlu0 %v1483
        %v1515 = vpop.xlane.xlu0 %1514
        %1516 = vadd.xlane.f32.xlu0 %v1485
        %v1517 = vpop.xlane.xlu0 %1516
        %1518 = vadd.xlane.f32.xlu0 %v1487
        %v1519 = vpop.xlane.xlu0 %1518
        %1520 = vadd.xlane.f32.xlu0 %v1489
        %v1521 = vpop.xlane.xlu0 %1520
        %1522 = vadd.xlane.f32.xlu0 %v1491
        %v1523 = vpop.xlane.xlu0 %1522
        %v1524 = vrcp.pop %v1493
        %v1525 = vrcp.pop %v1495
        %v1526 = vrcp.pop %v1497
        %v1527 = vrcp.pop %v1499
        %v1528 = vrcp.pop %v1501
        %v1529 = vrcp.pop %v1503
        %v1530 = vrcp.pop %v1505
        %v1531 = vrcp.pop %v1507
        %v1532 = vrcp.pop %v1509
        %v1533 = vrcp.pop %v1511
        %v1534 = vrcp.pop %v1513
        %v1535 = vrcp.pop %v1515
        %v1536 = vrcp.pop %v1517
        %v1537 = vrcp.pop %v1519
        %v1538 = vrcp.pop %v1521
        %v1539 = vrcp.pop %v1523
        %v1540 = vmul.f32 %v1461, %v1524
        %v1541 = vmul.f32 %v1463, %v1525
        %v1542 = vmul.f32 %v1465, %v1526
        %v1543 = vmul.f32 %v1467, %v1527
        %v1544 = vmul.f32 %v1469, %v1528
        %v1545 = vmul.f32 %v1471, %v1529
        %v1546 = vmul.f32 %v1473, %v1530
        %v1547 = vmul.f32 %v1475, %v1531
        %v1548 = vmul.f32 %v1477, %v1532
        %v1549 = vmul.f32 %v1479, %v1533
        %v1550 = vmul.f32 %v1481, %v1534
        %v1551 = vmul.f32 %v1483, %v1535
        %v1552 = vmul.f32 %v1485, %v1536
        %v1553 = vmul.f32 %v1487, %v1537
        %v1554 = vmul.f32 %v1489, %v1538
        %v1555 = vmul.f32 %v1491, %v1539
        %v1556 = vpack.c.bf16 %v1541, %v1540
        %v1557 = vpack.c.bf16 %v1543, %v1542
        %v1558 = vpack.c.bf16 %v1545, %v1544
        %v1559 = vpack.c.bf16 %v1547, %v1546
        %v1560 = vpack.c.bf16 %v1549, %v1548
        %v1561 = vpack.c.bf16 %v1551, %v1550
        %v1562 = vpack.c.bf16 %v1553, %v1552
        %v1563 = vpack.c.bf16 %v1555, %v1554
        %1564 = vmatprep.subr.bf16.mxu0 0
        %1565 = vmatpush1.bf16.msra.mxu0 %v1263
        %1566 = vmatprep.subr.bf16.mxu0 0
        %1567 = vmatpush1.bf16.msra.mxu0 %v1262
        %1568 = vmatprep.subr.bf16.mxu0 0
        %1569 = vmatpush1.bf16.msra.mxu0 %v1261
        %1570 = vmatprep.subr.bf16.mxu0 0
        %1571 = vmatpush1.bf16.msra.mxu0 %v1260
        %1572 = vmatprep.subr.bf16.mxu0 0
        %1573 = vmatpush1.bf16.msra.mxu0 %v1259
        %1574 = vmatprep.subr.bf16.mxu0 0
        %1575 = vmatpush1.bf16.msra.mxu0 %v1258
        %1576 = vmatprep.subr.bf16.mxu0 0
        %1577 = vmatpush1.bf16.msra.mxu0 %v1257
        %1578 = vmatprep.subr.bf16.mxu0 0
        %1579 = vmatpush1.bf16.msra.mxu0 %v1256
        %1580 = vmatprep.subr.bf16.mxu0 0
        %1581 = vmatpush2.bf16.msra.mxu0 0
        %1582 = vmatprep.subr.bf16.mxu0 0
        %1583 = vmatpush2.bf16.msra.mxu0 0
        %1584 = vmatprep.subr.bf16.mxu0 0
        %1585 = vmatpush2.bf16.msra.mxu0 0
        %1586 = vmatprep.subr.bf16.mxu0 0
        %1587 = vmatpush2.bf16.msra.mxu0 0
        %1588 = vmatprep.subr.bf16.mxu0 0
        %1589 = vmatpush2.bf16.msra.mxu0 0
        %1590 = vmatprep.subr.bf16.mxu0 0
        %1591 = vmatpush2.bf16.msra.mxu0 0
        %1592 = vmatprep.subr.bf16.mxu0 0
        %1593 = vmatpush2.bf16.msra.mxu0 0
        %1594 = vmatprep.subr.bf16.mxu0 0
        %1595 = vmatpush2.bf16.msra.mxu0 0
        %1596 = vmatprep.mubr.bf16.mxu0 0
        %1597 = vmatmul.mubr.bf16.gmra.mxu0 %v1556
        %v1598 = vpop.f32.mrf.mxu0
        %v1599 = vadd.f32 0.0, %v1598
        %v1600 = vpop.f32.mrf.mxu0
        %v1601 = vpop.f32.mrf.mxu0
        %v1602 = vadd.f32 0.0, %v1601
        %v1603 = vpop.f32.mrf.mxu0
        %1604 = vmatprep.mubr.bf16.mxu0 0
        %1605 = vmatmul.mubr.bf16.gmra.mxu0 %v1557
        %v1606 = vpop.f32.mrf.mxu0
        %v1607 = vadd.f32 0.0, %v1606
        %v1608 = vpop.f32.mrf.mxu0
        %v1609 = vpop.f32.mrf.mxu0
        %v1610 = vadd.f32 0.0, %v1609
        %v1611 = vpop.f32.mrf.mxu0
        %1612 = vmatprep.mubr.bf16.mxu0 0
        %1613 = vmatmul.mubr.bf16.gmra.mxu0 %v1558
        %v1614 = vpop.f32.mrf.mxu0
        %v1615 = vadd.f32 0.0, %v1614
        %v1616 = vpop.f32.mrf.mxu0
        %v1617 = vpop.f32.mrf.mxu0
        %v1618 = vadd.f32 0.0, %v1617
        %v1619 = vpop.f32.mrf.mxu0
        %1620 = vmatprep.mubr.bf16.mxu0 0
        %1621 = vmatmul.mubr.bf16.gmra.mxu0 %v1559
        %v1622 = vpop.f32.mrf.mxu0
        %v1623 = vadd.f32 0.0, %v1622
        %v1624 = vpop.f32.mrf.mxu0
        %v1625 = vpop.f32.mrf.mxu0
        %v1626 = vadd.f32 0.0, %v1625
        %v1627 = vpop.f32.mrf.mxu0
        %1628 = vmatprep.mubr.bf16.mxu0 0
        %1629 = vmatmul.mubr.bf16.gmra.mxu0 %v1560
        %v1630 = vpop.f32.mrf.mxu0
        %v1631 = vadd.f32 0.0, %v1630
        %v1632 = vpop.f32.mrf.mxu0
        %v1633 = vpop.f32.mrf.mxu0
        %v1634 = vadd.f32 0.0, %v1633
        %v1635 = vpop.f32.mrf.mxu0
        %1636 = vmatprep.mubr.bf16.mxu0 0
        %1637 = vmatmul.mubr.bf16.gmra.mxu0 %v1561
        %v1638 = vpop.f32.mrf.mxu0
        %v1639 = vadd.f32 0.0, %v1638
        %v1640 = vpop.f32.mrf.mxu0
        %v1641 = vpop.f32.mrf.mxu0
        %v1642 = vadd.f32 0.0, %v1641
        %v1643 = vpop.f32.mrf.mxu0
        %1644 = vmatprep.mubr.bf16.mxu0 0
        %1645 = vmatmul.mubr.bf16.gmra.mxu0 %v1562
        %v1646 = vpop.f32.mrf.mxu0
        %v1647 = vadd.f32 0.0, %v1646
        %v1648 = vpop.f32.mrf.mxu0
        %v1649 = vpop.f32.mrf.mxu0
        %v1650 = vadd.f32 0.0, %v1649
        %v1651 = vpop.f32.mrf.mxu0
        %1652 = vmatprep.mubr.bf16.mxu0 0
        %1653 = vmatmul.mubr.bf16.gmra.mxu0 %v1563
        %v1654 = vpop.f32.mrf.mxu0
        %v1655 = vadd.f32 0.0, %v1654
        %v1656 = vpop.f32.mrf.mxu0
        %v1657 = vpop.f32.mrf.mxu0
        %v1658 = vadd.f32 0.0, %v1657
        %v1659 = vpop.f32.mrf.mxu0
        %1660 = vdwg.mxu0
        %v1661 = vpack.c.bf16 %v1602, %v1599
        %v1662 = vpack.c.bf16 %v1610, %v1607
        %v1663 = vpack.c.bf16 %v1618, %v1615
        %v1664 = vpack.c.bf16 %v1626, %v1623
        %v1665 = vpack.c.bf16 %v1634, %v1631
        %v1666 = vpack.c.bf16 %v1642, %v1639
        %v1667 = vpack.c.bf16 %v1650, %v1647
        %v1668 = vpack.c.bf16 %v1658, %v1655
        %v1677 = vunpack.c.l.b16 %v1661
        %v1678 = vunpack.c.h.b16 %v1661
        %v1679 = vunpack.c.l.b16 %v1662
        %v1680 = vunpack.c.h.b16 %v1662
        %v1681 = vunpack.c.l.b16 %v1663
        %v1682 = vunpack.c.h.b16 %v1663
        %v1683 = vunpack.c.l.b16 %v1664
        %v1684 = vunpack.c.h.b16 %v1664
        %v1685 = vunpack.c.l.b16 %v1665
        %v1686 = vunpack.c.h.b16 %v1665
        %v1687 = vunpack.c.l.b16 %v1666
        %v1688 = vunpack.c.h.b16 %v1666
        %v1689 = vunpack.c.l.b16 %v1667
        %v1690 = vunpack.c.h.b16 %v1667
        %v1691 = vunpack.c.l.b16 %v1668
        %v1692 = vunpack.c.h.b16 %v1668
        %v1693 = vpack.c.b16 %v1677, %v1677
        %v1694 = vpack.c.b16 %v1678, %v1678
        %v1695 = vpack.c.b16 %v1679, %v1679
        %v1696 = vpack.c.b16 %v1680, %v1680
        %v1697 = vpack.c.b16 %v1681, %v1681
        %v1698 = vpack.c.b16 %v1682, %v1682
        %v1699 = vpack.c.b16 %v1683, %v1683
        %v1700 = vpack.c.b16 %v1684, %v1684
        %v1701 = vpack.c.b16 %v1685, %v1685
        %v1702 = vpack.c.b16 %v1686, %v1686
        %v1703 = vpack.c.b16 %v1687, %v1687
        %v1704 = vpack.c.b16 %v1688, %v1688
        %v1705 = vpack.c.b16 %v1689, %v1689
        %v1706 = vpack.c.b16 %v1690, %v1690
        %v1707 = vpack.c.b16 %v1691, %v1691
        %v1708 = vpack.c.b16 %v1692, %v1692
        %vm1725 = vcmask 519168
        %1726 = vst.msk [vmem:[%s178] sm:$0xf] %vm1725, %v1693
        %1727 = vst.msk [vmem:[%s178 + $0x4] sm:$0xf] %vm1725, %v1694
        %1728 = vst.msk [vmem:[%s178 + $0x8] sm:$0xf] %vm1725, %v1695
        %1729 = vst.msk [vmem:[%s178 + $0xc] sm:$0xf] %vm1725, %v1696
        %1730 = vst.msk [vmem:[%s178 + $0x10] sm:$0xf] %vm1725, %v1697
        %1731 = vst.msk [vmem:[%s178 + $0x14] sm:$0xf] %vm1725, %v1698
        %1732 = vst.msk [vmem:[%s178 + $0x18] sm:$0xf] %vm1725, %v1699
        %1733 = vst.msk [vmem:[%s178 + $0x1c] sm:$0xf] %vm1725, %v1700
        %1734 = vst.msk [vmem:[%s178 + $0x20] sm:$0xf] %vm1725, %v1701
        %1735 = vst.msk [vmem:[%s178 + $0x24] sm:$0xf] %vm1725, %v1702
        %1736 = vst.msk [vmem:[%s178 + $0x28] sm:$0xf] %vm1725, %v1703
        %1737 = vst.msk [vmem:[%s178 + $0x2c] sm:$0xf] %vm1725, %v1704
        %1738 = vst.msk [vmem:[%s178 + $0x30] sm:$0xf] %vm1725, %v1705
        %1739 = vst.msk [vmem:[%s178 + $0x34] sm:$0xf] %vm1725, %v1706
        %1740 = vst.msk [vmem:[%s178 + $0x38] sm:$0xf] %vm1725, %v1707
        %1741 = vst.msk [vmem:[%s178 + $0x3c] sm:$0xf] %vm1725, %v1708
        %p1742 = scmp.lt.s32.totalorder %s17, 3
        %s1743 = scalar_select %p1742, %s17, 3
        %s1744 = smul.addr %s1743, 16
        %s1745 = smul.addr %s1744, 4
        %s1746 = scalar_lea.vmem %s2, %s1745
        // Predicated region
        $region37: #{tpu_custom_call.1} parent=27 // pred_check
          %p1747 = pneg %p82
        $region38: #{tpu_custom_call.1} parent=27 // pred_check_branch
          %1749 = sbr.rel (%p1747) target = $region40
        $region39: #{tpu_custom_call.1} parent=27 // pred_region
          _
        $region40: #{tpu_custom_call.1} parent=27 // pred_fallthru
          _
      $region28: #{tpu_custom_call.1} parent=5 // pred_fallthru
        _
      %p1750 = scmp.le.s32.totalorder 2, %s12
      // Predicated region
      $region41: #{tpu_custom_call.1} parent=5 // pred_check
        %p1751 = pneg %p1750
      $region42: #{tpu_custom_call.1} parent=5 // pred_check_branch
        %1753 = sbr.rel (%p1751) target = $region44
      $region43: #{tpu_custom_call.1} parent=5 // pred_region
        %s1754 = ssub.s32 %s12, 2
        // Predicated region
        $region45: #{tpu_custom_call.1} parent=43 // pred_check
          %p1755 = pneg %p88
        $region46: #{tpu_custom_call.1} parent=43 // pred_check_branch
          %1757 = sbr.rel (%p1755) target = $region48
        $region47: #{tpu_custom_call.1} parent=43 // pred_region
          %p1758 = scmp.lt.s32.totalorder %s18, 3
          %s1759 = scalar_select %p1758, %s18, 3
          %s1760 = smul.addr %s1759, 16
          %s1761 = smul.addr %s1760, 4
          %s1762 = scalar_lea.vmem %s2, %s1761
        $region48: #{tpu_custom_call.1} parent=43 // pred_fallthru
          _
      $region44: #{tpu_custom_call.1} parent=5 // pred_fallthru
        _
    $region6: #{tpu_custom_call.1} parent=1 // loop_footer
      %s16 = sadd.s32 1, %s12
    $region7: #{tpu_custom_call.1} parent=1 // loop_footer_branch
      %11 = sbr.rel target = $region3
    $region8: #{tpu_custom_call.1} parent=1 // loop_exit
      _
    %1763 = vsyncpa [#allocation3], 1
    %s1764 = scalar_lea.sflag [#allocation3], 1
    %1765 = vsyncpa %s1764, 1
    %1766 = vsyncpa [#allocation5], 1

</llo_original>
